<compile_context>
chip_gen: v5e
topology: v5e:2x2
jax: 0.10.0
libtpu: 0.0.40
codegen_flags: <defaults>
</compile_context>

<pallas_src>
import jax
import jax.numpy as jnp
from jax import lax
from jax.experimental import pallas as pl
from jax.experimental.pallas import tpu as pltpu


def _round_up(x, m):
    return (x + m - 1) // m * m


# --------------------------------------------------------------------------
# Shared in-kernel tail: + pos_embed + type_embed, then LayerNorm (all f32).
# --------------------------------------------------------------------------
def _pos_type_layernorm(x, pid, tid, pos_ref, type_ref, ln_ref, *, rows, eps):
    P = pos_ref.shape[0]
    TV = type_ref.shape[0]

    # Learnable positional embedding: exact row-select via one-hot matmul
    # against the VMEM-resident table (HIGHEST keeps the f32 table exact).
    onehot_p = (lax.broadcasted_iota(jnp.int32, (rows, P), 1) == pid).astype(jnp.float32)
    x = x + jnp.dot(onehot_p, pos_ref[...].astype(jnp.float32),
                    preferred_element_type=jnp.float32,
                    precision=lax.Precision.HIGHEST)

    # Token-type embedding: tiny vocab -> exact VPU select chain (frees the
    # MXU / vector-extended slot); one-hot matmul only for larger type vocabs.
    trows = type_ref[...].astype(jnp.float32)
    if TV <= 4:
        t_add = jnp.broadcast_to(trows[0:1, :], (rows, trows.shape[1]))
        for t in range(1, TV):
            t_add = jnp.where(tid == t, trows[t:t + 1, :], t_add)
        x = x + t_add
    else:
        onehot_t = (lax.broadcasted_iota(jnp.int32, (rows, TV), 1) == tid).astype(jnp.float32)
        x = x + jnp.dot(onehot_t, trows, preferred_element_type=jnp.float32,
                        precision=lax.Precision.HIGHEST)

    # LayerNorm over the embedding dim (two-pass / centered variance).
    mu = jnp.mean(x, axis=-1, keepdims=True)
    xc = x - mu
    var = jnp.mean(xc * xc, axis=-1, keepdims=True)
    y = xc * lax.rsqrt(var + eps)
    gamma = ln_ref[0:1, :].astype(jnp.float32)
    beta = ln_ref[1:2, :].astype(jnp.float32)
    return y * gamma + beta
    # TODO(synk): dropout (self.out_dropout) omitted -- module exercised with dropout=0.0 / eval.


# --------------------------------------------------------------------------
# Fast path: word table fully VMEM-resident (small vocab), no manual DMA.
# --------------------------------------------------------------------------
def _make_vmem_kernel(T, scale_val, eps):
    def kernel(ids_ref, word_ref, pos_ref, type_ref, ln_ref, o_ref):
        V = word_ref.shape[0]
        ids = ids_ref[...]                       # (T, 3) int32: [wid, pid, tid]
        wid = ids[:, 0:1]
        pid = ids[:, 1:2]
        tid = ids[:, 2:3]

        # Exact gather via one-hot matmul against the resident word table.
        onehot_w = (lax.broadcasted_iota(jnp.int32, (T, V), 1) == wid).astype(jnp.float32)
        x = jnp.dot(onehot_w, word_ref[...].astype(jnp.float32),
                    preferred_element_type=jnp.float32,
                    precision=lax.Precision.HIGHEST)
        if scale_val != 1.0:
            x = x * scale_val                    # word emb * sqrt(D)

        y = _pos_type_layernorm(x, pid, tid, pos_ref, type_ref, ln_ref,
                                rows=T, eps=eps)
        o_ref[...] = y.astype(o_ref.dtype)
    return kernel


# --------------------------------------------------------------------------
# General path: word table in HBM; in-step double-buffered row gather.
# --------------------------------------------------------------------------
def _make_dma_kernel(T, TS, NSUB, scale_val, eps):
    def kernel(wid_smem,                      # (N_pad,) int32 scalar prefetch (SMEM)
               word_hbm,                      # (V, D) word table, left in HBM
               ids_ref,                       # (T, 3) int32 [wid, pid, tid]
               pos_ref, type_ref, ln_ref,     # resident VMEM tables
               o_ref,                         # (T, D) output tile
               gbuf, gsem):                   # (2, TS, D) ping-pong buffer + 2 DMA sems
        base = pl.program_id(0) * T

        def issue(sub, slot):
            # Per-row DMAs word_hbm[row] -> gbuf[slot, r]; all signal gsem[slot].
            sub_base = base + sub * TS

            def body(r, carry):
                row = wid_smem[sub_base + r]
                pltpu.make_async_copy(word_hbm.at[row], gbuf.at[slot, r],
                                      gsem.at[slot]).start()
                return carry

            # Unrolled so SMEM id reads / descriptor builds / misc-slot issues pipeline.
            lax.fori_loop(0, TS, body, 0, unroll=8)

        def wait_all(slot):
            # Single aggregate wait for the whole (TS, D) sub-tile: the TS row
            # copies all signal gsem[slot]; the descriptor only sets the byte count.
            pltpu.make_async_copy(gbuf.at[slot], gbuf.at[slot], gsem.at[slot]).wait()

        # Prime sub-tile 0, then ping-pong: issue sub-tile s+1 while computing
        # sub-tile s.  No cross-grid-step DMA state -> safe under "parallel".
        issue(0, 0)

        @pl.loop(0, NSUB)
        def _(s):
            slot = jnp.bitwise_and(s, 1)

            @pl.when(s + 1 < NSUB)
            def _():
                issue(s + 1, 1 - slot)

            wait_all(slot)

            off = pl.multiple_of(s * TS, TS)
            x = gbuf[slot].astype(jnp.float32)
            if scale_val != 1.0:
                x = x * scale_val                              # word emb * sqrt(D)
            sub_ids = ids_ref[pl.ds(off, TS), :]               # (TS, 3)
            pid = sub_ids[:, 1:2]
            tid = sub_ids[:, 2:3]
            y = _pos_type_layernorm(x, pid, tid, pos_ref, type_ref, ln_ref,
                                    rows=TS, eps=eps)
            o_ref[pl.ds(off, TS), :] = y.astype(o_ref.dtype)
    return kernel


# --------------------------------------------------------------------------
# Host wrapper
# --------------------------------------------------------------------------
def unified_embedding(input_ids, position_ids, token_type_ids,
                      word_table, pos_table, type_table, gamma, beta,
                      *, scale=True, eps=1e-6, tokens_per_tile=512,
                      out_dtype=None, vmem_word_table_bytes=2 * 1024 * 1024):
    B, L = input_ids.shape
    V, D = word_table.shape
    P = pos_table.shape[0]
    TV = type_table.shape[0]
    N = B * L
    out_dtype = word_table.dtype if out_dtype is None else jnp.dtype(out_dtype)

    if position_ids is None:    # module defaults
        position_ids = jnp.broadcast_to(jnp.arange(L, dtype=jnp.int32)[None, :], (B, L))
    if token_type_ids is None:
        token_type_ids = jnp.zeros_like(input_ids)

    # ---- token tiling: >= 2 grid steps whenever possible (v7x megacore) -----
    half = _round_up(max(8, -(-N // 2)), 8)
    T = _round_up(min(int(tokens_per_tile), half), 8)
    N_pad = _round_up(N, T)
    num_tiles = N_pad // T

    # Sub-tile split of the in-kernel gather (ping-pong depth) for the DMA path.
    m = T // 8
    nsub = next(c for c in (4, 3, 2, 1) if m % c == 0)
    TS = T // nsub

    word_bytes = V * D * jnp.dtype(word_table.dtype).itemsize
    fast_path = (word_bytes <= int(vmem_word_table_bytes)) and V <= 1024

    # ---- host-side packing ---------------------------------------------------
    def _pad_flat(ids):
        flat = ids.reshape(N).astype(jnp.int32)
        return jnp.pad(flat, (0, N_pad - N))          # pad with id 0 (valid row)

    wids = _pad_flat(input_ids)
    # Merged per-token integer block: [word_id, position_id, type_id].
    ids = jnp.stack([wids, _pad_flat(position_ids), _pad_flat(token_type_ids)],
                    axis=-1)                          # (N_pad, 3) int32
    ln = jnp.stack([gamma, beta], axis=0).reshape(2, D).astype(jnp.float32)

    scale_val = float(D) ** 0.5 if scale else 1.0

    # ---- VMEM budget / compiler params ---------------------------------------
    out_isz = jnp.dtype(out_dtype).itemsize
    resident = (P * D * jnp.dtype(pos_table.dtype).itemsize
                + TV * D * jnp.dtype(type_table.dtype).itemsize
                + 2 * D * 4)
    if fast_path:
        resident += word_bytes
    est = (2 * resident                               # conservative: double-buffered tables
           + 2 * T * 3 * 4                            # ids blocks
           + 2 * T * D * out_isz                      # output tiles
           + (0 if fast_path
              else 2 * TS * D * jnp.dtype(word_table.dtype).itemsize))
    vmem_limit = int(min(max(2 * est, 32 << 20), 48 << 20))
    cparams = pltpu.CompilerParams(
        dimension_semantics=("parallel",),            # tokens independent -> both v7x TCs
        vmem_limit_bytes=vmem_limit)

    out_shape = jax.ShapeDtypeStruct((N_pad, D), out_dtype)

    def run(single_buffer_resident):
        def res_spec(shape, index_map):
            # Grid-invariant operands: request single buffering to halve VMEM.
            if single_buffer_resident:
                return pl.BlockSpec(shape, index_map, pipeline_mode=pl.Buffered(1))
            return pl.BlockSpec(shape, index_map)

        if fast_path:
            grid_spec = pltpu.PrefetchScalarGridSpec(
                num_scalar_prefetch=0,
                grid=(num_tiles,),
                in_specs=[
                    pl.BlockSpec((T, 3), lambda i: (i, 0)),     # [wid, pid, tid]
                    res_spec((V, D), lambda i: (0, 0)),         # word table (resident)
                    res_spec((P, D), lambda i: (0, 0)),         # pos table
                    res_spec((TV, D), lambda i: (0, 0)),        # type table
                    res_spec((2, D), lambda i: (0, 0)),         # LN gamma/beta
                ],
                out_specs=pl.BlockSpec((T, D), lambda i: (i, 0)),
            )
            return pl.pallas_call(
                _make_vmem_kernel(T, scale_val, eps),
                out_shape=out_shape,
                grid_spec=grid_spec,
                compiler_params=cparams,
            )(ids, word_table, pos_table, type_table, ln)

        grid_spec = pltpu.PrefetchScalarGridSpec(
            num_scalar_prefetch=1,                               # word ids -> SMEM
            grid=(num_tiles,),
            in_specs=[
                pl.BlockSpec(memory_space=pl.ANY),               # word table stays in HBM
                pl.BlockSpec((T, 3), lambda i, w: (i, 0)),       # [wid, pid, tid]
                res_spec((P, D), lambda i, w: (0, 0)),
                res_spec((TV, D), lambda i, w: (0, 0)),
                res_spec((2, D), lambda i, w: (0, 0)),
            ],
            out_specs=pl.BlockSpec((T, D), lambda i, w: (i, 0)),
            scratch_shapes=[
                pltpu.VMEM((2, TS, D), word_table.dtype),        # gather ping-pong buffer
                pltpu.SemaphoreType.DMA((2,)),                   # one DMA sem per slot
            ],
        )
        return pl.pallas_call(
            _make_dma_kernel(T, TS, nsub, scale_val, eps),
            out_shape=out_shape,
            grid_spec=grid_spec,
            compiler_params=cparams,
        )(wids, word_table, ids, pos_table, type_table, ln)

    try:
        out = run(single_buffer_resident=True)
    except Exception:
        # pipeline_mode=pl.Buffered(1) not supported by this JAX/Mosaic build:
        # retry with default (double-buffered) resident operands.
        out = run(single_buffer_resident=False)

    return out[:N].reshape(B, L, D)


# --------------------------------------------------------------------------
# Pure-JAX reference (mirrors the PyTorch module)
# --------------------------------------------------------------------------
def reference(input_ids, position_ids, token_type_ids,
              word_table, pos_table, type_table, gamma, beta,
              *, scale=True, eps=1e-6):
    D = word_table.shape[1]
    x = word_table[input_ids] * (float(D) ** 0.5 if scale else 1.0)
    x = x + pos_table[position_ids]
    x = x + type_table[token_type_ids]
    mu = x.mean(-1, keepdims=True)
    var = ((x - mu) ** 2).mean(-1, keepdims=True)
    return (x - mu) * jax.lax.rsqrt(var + eps) * gamma + beta


if __name__ == "__main__":
    eps = 1e-6

    def build(key, B, L, D, V, MAX_POS, TYPE_V):
        k_w, k_p, k_t, k_g, k_b, k_ids, k_types = jax.random.split(key, 7)
        std = D ** (-0.5)   # Embedding.reset_parameters: normal(0, D ** -0.5)
        word_table = jax.random.normal(k_w, (V, D), jnp.float32) * std
        pos_table = jax.random.normal(k_p, (MAX_POS, D), jnp.float32) * std
        type_table = jax.random.normal(k_t, (TYPE_V, D), jnp.float32) * std
        gamma = 1.0 + 0.1 * jax.random.normal(k_g, (D,), jnp.float32)
        beta = 0.05 * jax.random.normal(k_b, (D,), jnp.float32)
        input_ids = jax.random.randint(k_ids, (B, L), 0, V, jnp.int32)
        position_ids = jnp.broadcast_to(jnp.arange(L, dtype=jnp.int32)[None, :], (B, L))
        token_type_ids = jax.random.randint(k_types, (B, L), 0, TYPE_V, jnp.int32)
        return (input_ids, position_ids, token_type_ids,
                word_table, pos_table, type_table, gamma, beta)

    key = jax.random.PRNGKey(0)
    k1, k2 = jax.random.split(key)

    # Case 1: small module-consistent shapes (L=7 exercises token padding).
    # V=48 -> default call takes the VMEM-resident small-vocab fast path.
    args1 = build(k1, B=2, L=7, D=128, V=48, MAX_POS=16, TYPE_V=2)
    ref1 = reference(*args1, scale=True, eps=eps)

    out1 = jax.block_until_ready(unified_embedding(*args1, scale=True, eps=eps))
    assert out1.shape == ref1.shape
    assert float(jnp.max(jnp.abs(out1 - ref1))) < 2e-4, "fast path mismatch"

    # Same inputs, forcing the HBM-gather (large-vocab) path.
    out1b = jax.block_until_ready(unified_embedding(*args1, scale=True, eps=eps,
                                                    vmem_word_table_bytes=0))
    assert float(jnp.max(jnp.abs(out1b - ref1))) < 2e-4, "DMA path mismatch"

    # Case 2: larger tile so the DMA path exercises the multi-sub-tile
    # ping-pong gather (T=48 -> 3 sub-tiles of 16) across 2 grid steps.
    args2 = build(k2, B=2, L=48, D=128, V=512, MAX_POS=64, TYPE_V=2)
    ref2 = reference(*args2, scale=True, eps=eps)

    out2 = jax.block_until_ready(unified_embedding(*args2, scale=True, eps=eps,
                                                   vmem_word_table_bytes=0))
    assert float(jnp.max(jnp.abs(out2 - ref2))) < 2e-4, "DMA path mismatch (case 2)"

    out2b = jax.block_until_ready(unified_embedding(*args2, scale=True, eps=eps))
    assert float(jnp.max(jnp.abs(out2b - ref2))) < 2e-4, "fast path mismatch (case 2)"

    print("KERNEL_OK")
</pallas_src>

<mosaic_0001>
module attributes {stable_mosaic.version = 11 : i64} {
  func.func @kernel(%arg0: i32, %arg1: memref<8x3xi32, #tpu.memory_space<vmem>>, %arg2: memref<48x128xf32, #tpu.memory_space<vmem>>, %arg3: memref<16x128xf32, #tpu.memory_space<vmem>>, %arg4: memref<2x128xf32, #tpu.memory_space<vmem>>, %arg5: memref<2x128xf32, #tpu.memory_space<vmem>>, %arg6: memref<8x128xf32, #tpu.memory_space<vmem>>) attributes {dimension_semantics = [#tpu.dimension_semantics<parallel>], iteration_bounds = array<i64: 2>, scalar_prefetch = 0 : i64, scratch_operands = 0 : i64, tpu.core_type = #tpu.core_type<tc>, window_params = [{transform_indices = @transform_0, window_bounds = array<i64: 8, 3>}, {pipeline_mode = #tpu.pipeline_mode<synchronous>, transform_indices = @transform_1, window_bounds = array<i64: 48, 128>}, {pipeline_mode = #tpu.pipeline_mode<synchronous>, transform_indices = @transform_2, window_bounds = array<i64: 16, 128>}, {pipeline_mode = #tpu.pipeline_mode<synchronous>, transform_indices = @transform_3, window_bounds = array<i64: 2, 128>}, {pipeline_mode = #tpu.pipeline_mode<synchronous>, transform_indices = @transform_4, window_bounds = array<i64: 2, 128>}, {transform_indices = @transform_5, window_bounds = array<i64: 8, 128>}]} {
    %c0 = arith.constant 0 : index
    %c0_0 = arith.constant 0 : index
    %0 = vector.load %arg1[%c0, %c0_0] : memref<8x3xi32, #tpu.memory_space<vmem>>, vector<8x3xi32>
    %1 = vector.extract_strided_slice %0 {offsets = [0, 0], sizes = [8, 1], strides = [1, 1]} : vector<8x3xi32> to vector<8x1xi32>
    %2 = vector.extract_strided_slice %0 {offsets = [0, 1], sizes = [8, 1], strides = [1, 1]} : vector<8x3xi32> to vector<8x1xi32>
    %3 = vector.extract_strided_slice %0 {offsets = [0, 2], sizes = [8, 1], strides = [1, 1]} : vector<8x3xi32> to vector<8x1xi32>
    %4 = tpu.iota {dimensions = array<i32: 1>} : vector<8x48xi32>
    %5 = vector.broadcast %1 : vector<8x1xi32> to vector<8x48xi32>
    %6 = arith.cmpi eq, %4, %5 : vector<8x48xi32>
    %7 = arith.extui %6 : vector<8x48xi1> to vector<8x48xi32>
    %8 = arith.sitofp %7 : vector<8x48xi32> to vector<8x48xf32>
    %c0_1 = arith.constant 0 : index
    %c0_2 = arith.constant 0 : index
    %9 = vector.load %arg2[%c0_1, %c0_2] : memref<48x128xf32, #tpu.memory_space<vmem>>, vector<48x128xf32>
    %cst = arith.constant dense<0.000000e+00> : vector<8x128xf32>
    %10 = tpu.matmul %8, %9, %cst {dimension_numbers = #tpu.dot_dimension_numbers<[1], [0], [0], [1], [0, 0, 1, 1], [], []>, precision = #tpu.contract_precision<fp32>} : vector<8x48xf32>, vector<48x128xf32>, vector<8x128xf32> -> vector<8x128xf32>
    %cst_3 = arith.constant 11.3137083 : f32
    %11 = vector.broadcast %cst_3 : f32 to vector<8x128xf32>
    %12 = arith.mulf %10, %11 : vector<8x128xf32>
    %13 = tpu.iota {dimensions = array<i32: 1>} : vector<8x16xi32>
    %14 = vector.broadcast %2 : vector<8x1xi32> to vector<8x16xi32>
    %15 = arith.cmpi eq, %13, %14 : vector<8x16xi32>
    %16 = arith.extui %15 : vector<8x16xi1> to vector<8x16xi32>
    %17 = arith.sitofp %16 : vector<8x16xi32> to vector<8x16xf32>
    %c0_4 = arith.constant 0 : index
    %c0_5 = arith.constant 0 : index
    %18 = vector.load %arg3[%c0_4, %c0_5] : memref<16x128xf32, #tpu.memory_space<vmem>>, vector<16x128xf32>
    %cst_6 = arith.constant dense<0.000000e+00> : vector<8x128xf32>
    %19 = tpu.matmul %17, %18, %cst_6 {dimension_numbers = #tpu.dot_dimension_numbers<[1], [0], [0], [1], [0, 0, 1, 1], [], []>, precision = #tpu.contract_precision<fp32>} : vector<8x16xf32>, vector<16x128xf32>, vector<8x128xf32> -> vector<8x128xf32>
    %20 = arith.addf %12, %19 : vector<8x128xf32>
    %c0_7 = arith.constant 0 : index
    %c0_8 = arith.constant 0 : index
    %21 = vector.load %arg4[%c0_7, %c0_8] : memref<2x128xf32, #tpu.memory_space<vmem>>, vector<2x128xf32>
    %22 = vector.extract_strided_slice %21 {offsets = [0, 0], sizes = [1, 128], strides = [1, 1]} : vector<2x128xf32> to vector<1x128xf32>
    %23 = vector.shape_cast %22 : vector<1x128xf32> to vector<1x128xf32>
    %24 = vector.broadcast %23 : vector<1x128xf32> to vector<8x128xf32>
    %c1_i32 = arith.constant 1 : i32
    %25 = vector.broadcast %c1_i32 : i32 to vector<8x1xi32>
    %26 = arith.cmpi eq, %3, %25 : vector<8x1xi32>
    %27 = vector.extract_strided_slice %21 {offsets = [1, 0], sizes = [1, 128], strides = [1, 1]} : vector<2x128xf32> to vector<1x128xf32>
    %28 = vector.shape_cast %26 : vector<8x1xi1> to vector<8x1xi1>
    %29 = vector.broadcast %28 : vector<8x1xi1> to vector<8x128xi1>
    %30 = vector.shape_cast %27 : vector<1x128xf32> to vector<1x128xf32>
    %31 = vector.broadcast %30 : vector<1x128xf32> to vector<8x128xf32>
    %32 = arith.select %29, %31, %24 : vector<8x128xi1>, vector<8x128xf32>
    %33 = arith.addf %20, %32 : vector<8x128xf32>
    %cst_9 = arith.constant dense<0.000000e+00> : vector<8xf32>
    %34 = vector.multi_reduction <add>, %33, %cst_9 [1] : vector<8x128xf32> to vector<8xf32>
    %35 = vector.shape_cast %34 : vector<8xf32> to vector<8x1xf32>
    %cst_10 = arith.constant 1.280000e+02 : f32
    %36 = vector.broadcast %cst_10 : f32 to vector<8x1xf32>
    %37 = arith.divf %35, %36 : vector<8x1xf32>
    %38 = vector.broadcast %37 : vector<8x1xf32> to vector<8x128xf32>
    %39 = arith.subf %33, %38 : vector<8x128xf32>
    %40 = arith.mulf %39, %39 : vector<8x128xf32>
    %cst_11 = arith.constant dense<0.000000e+00> : vector<8xf32>
    %41 = vector.multi_reduction <add>, %40, %cst_11 [1] : vector<8x128xf32> to vector<8xf32>
    %42 = vector.shape_cast %41 : vector<8xf32> to vector<8x1xf32>
    %cst_12 = arith.constant 1.280000e+02 : f32
    %43 = vector.broadcast %cst_12 : f32 to vector<8x1xf32>
    %44 = arith.divf %42, %43 : vector<8x1xf32>
    %cst_13 = arith.constant 9.99999997E-7 : f32
    %45 = vector.broadcast %cst_13 : f32 to vector<8x1xf32>
    %46 = arith.addf %44, %45 : vector<8x1xf32>
    %47 = math.rsqrt %46 : vector<8x1xf32>
    %48 = vector.broadcast %47 : vector<8x1xf32> to vector<8x128xf32>
    %49 = arith.mulf %39, %48 : vector<8x128xf32>
    %c0_14 = arith.constant 0 : index
    %c0_15 = arith.constant 0 : index
    %50 = vector.load %arg5[%c0_14, %c0_15] : memref<2x128xf32, #tpu.memory_space<vmem>>, vector<1x128xf32>
    %c1 = arith.constant 1 : index
    %c0_16 = arith.constant 0 : index
    %51 = vector.load %arg5[%c1, %c0_16] : memref<2x128xf32, #tpu.memory_space<vmem>>, vector<1x128xf32>
    %52 = vector.broadcast %50 : vector<1x128xf32> to vector<8x128xf32>
    %53 = arith.mulf %49, %52 : vector<8x128xf32>
    %54 = vector.broadcast %51 : vector<1x128xf32> to vector<8x128xf32>
    %55 = arith.addf %53, %54 : vector<8x128xf32>
    %c0_17 = arith.constant 0 : index
    %c0_18 = arith.constant 0 : index
    %56 = vector.load %arg6[%c0_17, %c0_18] : memref<8x128xf32, #tpu.memory_space<vmem>>, vector<8x128xf32>
    tpu.vector_store %arg6[%c0_17, %c0_18], %55 {strides = array<i32>} : memref<8x128xf32, #tpu.memory_space<vmem>>, vector<8x128xf32>,
    return
  }
  func.func @transform_0(%arg0: i32) -> (i32, i32) {
    %c0_i32 = arith.constant 0 : i32
    %c0_i32_0 = arith.constant 0 : i32
    return %arg0, %c0_i32 : i32, i32
  }
  func.func @transform_1(%arg0: i32) -> (i32, i32) {
    %c0_i32 = arith.constant 0 : i32
    %c0_i32_0 = arith.constant 0 : i32
    %c0_i32_1 = arith.constant 0 : i32
    return %c0_i32, %c0_i32_0 : i32, i32
  }
  func.func @transform_2(%arg0: i32) -> (i32, i32) {
    %c0_i32 = arith.constant 0 : i32
    %c0_i32_0 = arith.constant 0 : i32
    %c0_i32_1 = arith.constant 0 : i32
    return %c0_i32, %c0_i32_0 : i32, i32
  }
  func.func @transform_3(%arg0: i32) -> (i32, i32) {
    %c0_i32 = arith.constant 0 : i32
    %c0_i32_0 = arith.constant 0 : i32
    %c0_i32_1 = arith.constant 0 : i32
    return %c0_i32, %c0_i32_0 : i32, i32
  }
  func.func @transform_4(%arg0: i32) -> (i32, i32) {
    %c0_i32 = arith.constant 0 : i32
    %c0_i32_0 = arith.constant 0 : i32
    %c0_i32_1 = arith.constant 0 : i32
    return %c0_i32, %c0_i32_0 : i32, i32
  }
  func.func @transform_5(%arg0: i32) -> (i32, i32) {
    %c0_i32 = arith.constant 0 : i32
    %c0_i32_0 = arith.constant 0 : i32
    return %arg0, %c0_i32 : i32, i32
  }
}

module attributes {stable_mosaic.version = 11 : i64} {
  func.func @kernel(%arg0: i32, %arg1: memref<8x3xi32, #tpu.memory_space<vmem>>, %arg2: memref<48x128xf32, #tpu.memory_space<vmem>>, %arg3: memref<16x128xf32, #tpu.memory_space<vmem>>, %arg4: memref<2x128xf32, #tpu.memory_space<vmem>>, %arg5: memref<2x128xf32, #tpu.memory_space<vmem>>, %arg6: memref<8x128xf32, #tpu.memory_space<vmem>>) attributes {dimension_semantics = [#tpu.dimension_semantics<parallel>], iteration_bounds = array<i64: 2>, scalar_prefetch = 0 : i64, scratch_operands = 0 : i64, tpu.core_type = #tpu.core_type<tc>, window_params = [{transform_indices = @transform_0, window_bounds = array<i64: 8, 3>}, {pipeline_mode = #tpu.pipeline_mode<synchronous>, transform_indices = @transform_1, window_bounds = array<i64: 48, 128>}, {pipeline_mode = #tpu.pipeline_mode<synchronous>, transform_indices = @transform_2, window_bounds = array<i64: 16, 128>}, {pipeline_mode = #tpu.pipeline_mode<synchronous>, transform_indices = @transform_3, window_bounds = array<i64: 2, 128>}, {pipeline_mode = #tpu.pipeline_mode<synchronous>, transform_indices = @transform_4, window_bounds = array<i64: 2, 128>}, {transform_indices = @transform_5, window_bounds = array<i64: 8, 128>}]} {
    %c0 = arith.constant 0 : index
    %c0_0 = arith.constant 0 : index
    %0 = vector.load %arg1[%c0, %c0_0] : memref<8x3xi32, #tpu.memory_space<vmem>>, vector<8x3xi32>
    %1 = vector.extract_strided_slice %0 {offsets = [0, 0], sizes = [8, 1], strides = [1, 1]} : vector<8x3xi32> to vector<8x1xi32>
    %2 = vector.extract_strided_slice %0 {offsets = [0, 1], sizes = [8, 1], strides = [1, 1]} : vector<8x3xi32> to vector<8x1xi32>
    %3 = vector.extract_strided_slice %0 {offsets = [0, 2], sizes = [8, 1], strides = [1, 1]} : vector<8x3xi32> to vector<8x1xi32>
    %4 = tpu.iota {dimensions = array<i32: 1>} : vector<8x48xi32>
    %5 = vector.broadcast %1 : vector<8x1xi32> to vector<8x48xi32>
    %6 = arith.cmpi eq, %4, %5 : vector<8x48xi32>
    %7 = arith.extui %6 : vector<8x48xi1> to vector<8x48xi32>
    %8 = arith.sitofp %7 : vector<8x48xi32> to vector<8x48xf32>
    %c0_1 = arith.constant 0 : index
    %c0_2 = arith.constant 0 : index
    %9 = vector.load %arg2[%c0_1, %c0_2] : memref<48x128xf32, #tpu.memory_space<vmem>>, vector<48x128xf32>
    %cst = arith.constant dense<0.000000e+00> : vector<8x128xf32>
    %10 = tpu.matmul %8, %9, %cst {dimension_numbers = #tpu.dot_dimension_numbers<[1], [0], [0], [1], [0, 0, 1, 1], [], []>, precision = #tpu.contract_precision<fp32>} : vector<8x48xf32>, vector<48x128xf32>, vector<8x128xf32> -> vector<8x128xf32>
    %cst_3 = arith.constant 11.3137083 : f32
    %11 = vector.broadcast %cst_3 : f32 to vector<8x128xf32>
    %12 = arith.mulf %10, %11 : vector<8x128xf32>
    %13 = tpu.iota {dimensions = array<i32: 1>} : vector<8x16xi32>
    %14 = vector.broadcast %2 : vector<8x1xi32> to vector<8x16xi32>
    %15 = arith.cmpi eq, %13, %14 : vector<8x16xi32>
    %16 = arith.extui %15 : vector<8x16xi1> to vector<8x16xi32>
    %17 = arith.sitofp %16 : vector<8x16xi32> to vector<8x16xf32>
    %c0_4 = arith.constant 0 : index
    %c0_5 = arith.constant 0 : index
    %18 = vector.load %arg3[%c0_4, %c0_5] : memref<16x128xf32, #tpu.memory_space<vmem>>, vector<16x128xf32>
    %cst_6 = arith.constant dense<0.000000e+00> : vector<8x128xf32>
    %19 = tpu.matmul %17, %18, %cst_6 {dimension_numbers = #tpu.dot_dimension_numbers<[1], [0], [0], [1], [0, 0, 1, 1], [], []>, precision = #tpu.contract_precision<fp32>} : vector<8x16xf32>, vector<16x128xf32>, vector<8x128xf32> -> vector<8x128xf32>
    %20 = arith.addf %12, %19 : vector<8x128xf32>
    %c0_7 = arith.constant 0 : index
    %c0_8 = arith.constant 0 : index
    %21 = vector.load %arg4[%c0_7, %c0_8] : memref<2x128xf32, #tpu.memory_space<vmem>>, vector<2x128xf32>
    %22 = vector.extract_strided_slice %21 {offsets = [0, 0], sizes = [1, 128], strides = [1, 1]} : vector<2x128xf32> to vector<1x128xf32>
    %23 = vector.shape_cast %22 : vector<1x128xf32> to vector<1x128xf32>
    %24 = vector.broadcast %23 : vector<1x128xf32> to vector<8x128xf32>
    %c1_i32 = arith.constant 1 : i32
    %25 = vector.broadcast %c1_i32 : i32 to vector<8x1xi32>
    %26 = arith.cmpi eq, %3, %25 : vector<8x1xi32>
    %27 = vector.extract_strided_slice %21 {offsets = [1, 0], sizes = [1, 128], strides = [1, 1]} : vector<2x128xf32> to vector<1x128xf32>
    %28 = vector.shape_cast %26 : vector<8x1xi1> to vector<8x1xi1>
    %29 = vector.broadcast %28 : vector<8x1xi1> to vector<8x128xi1>
    %30 = vector.shape_cast %27 : vector<1x128xf32> to vector<1x128xf32>
    %31 = vector.broadcast %30 : vector<1x128xf32> to vector<8x128xf32>
    %32 = arith.select %29, %31, %24 : vector<8x128xi1>, vector<8x128xf32>
    %33 = arith.addf %20, %32 : vector<8x128xf32>
    %cst_9 = arith.constant dense<0.000000e+00> : vector<8xf32>
    %34 = vector.multi_reduction <add>, %33, %cst_9 [1] : vector<8x128xf32> to vector<8xf32>
    %35 = vector.shape_cast %34 : vector<8xf32> to vector<8x1xf32>
    %cst_10 = arith.constant 1.280000e+02 : f32
    %36 = vector.broadcast %cst_10 : f32 to vector<8x1xf32>
    %37 = arith.divf %35, %36 : vector<8x1xf32>
    %38 = vector.broadcast %37 : vector<8x1xf32> to vector<8x128xf32>
    %39 = arith.subf %33, %38 : vector<8x128xf32>
    %40 = arith.mulf %39, %39 : vector<8x128xf32>
    %cst_11 = arith.constant dense<0.000000e+00> : vector<8xf32>
    %41 = vector.multi_reduction <add>, %40, %cst_11 [1] : vector<8x128xf32> to vector<8xf32>
    %42 = vector.shape_cast %41 : vector<8xf32> to vector<8x1xf32>
    %cst_12 = arith.constant 1.280000e+02 : f32
    %43 = vector.broadcast %cst_12 : f32 to vector<8x1xf32>
    %44 = arith.divf %42, %43 : vector<8x1xf32>
    %cst_13 = arith.constant 9.99999997E-7 : f32
    %45 = vector.broadcast %cst_13 : f32 to vector<8x1xf32>
    %46 = arith.addf %44, %45 : vector<8x1xf32>
    %47 = math.rsqrt %46 : vector<8x1xf32>
    %48 = vector.broadcast %47 : vector<8x1xf32> to vector<8x128xf32>
    %49 = arith.mulf %39, %48 : vector<8x128xf32>
    %c0_14 = arith.constant 0 : index
    %c0_15 = arith.constant 0 : index
    %50 = vector.load %arg5[%c0_14, %c0_15] : memref<2x128xf32, #tpu.memory_space<vmem>>, vector<1x128xf32>
    %c1 = arith.constant 1 : index
    %c0_16 = arith.constant 0 : index
    %51 = vector.load %arg5[%c1, %c0_16] : memref<2x128xf32, #tpu.memory_space<vmem>>, vector<1x128xf32>
    %52 = vector.broadcast %50 : vector<1x128xf32> to vector<8x128xf32>
    %53 = arith.mulf %49, %52 : vector<8x128xf32>
    %54 = vector.broadcast %51 : vector<1x128xf32> to vector<8x128xf32>
    %55 = arith.addf %53, %54 : vector<8x128xf32>
    %c0_17 = arith.constant 0 : index
    %c0_18 = arith.constant 0 : index
    %56 = vector.load %arg6[%c0_17, %c0_18] : memref<8x128xf32, #tpu.memory_space<vmem>>, vector<8x128xf32>
    tpu.vector_store %arg6[%c0_17, %c0_18], %55 {strides = array<i32>} : memref<8x128xf32, #tpu.memory_space<vmem>>, vector<8x128xf32>,
    return
  }
  func.func @transform_0(%arg0: i32) -> (i32, i32) {
    %c0_i32 = arith.constant 0 : i32
    %c0_i32_0 = arith.constant 0 : i32
    return %arg0, %c0_i32 : i32, i32
  }
  func.func @transform_1(%arg0: i32) -> (i32, i32) {
    %c0_i32 = arith.constant 0 : i32
    %c0_i32_0 = arith.constant 0 : i32
    %c0_i32_1 = arith.constant 0 : i32
    return %c0_i32, %c0_i32_0 : i32, i32
  }
  func.func @transform_2(%arg0: i32) -> (i32, i32) {
    %c0_i32 = arith.constant 0 : i32
    %c0_i32_0 = arith.constant 0 : i32
    %c0_i32_1 = arith.constant 0 : i32
    return %c0_i32, %c0_i32_0 : i32, i32
  }
  func.func @transform_3(%arg0: i32) -> (i32, i32) {
    %c0_i32 = arith.constant 0 : i32
    %c0_i32_0 = arith.constant 0 : i32
    %c0_i32_1 = arith.constant 0 : i32
    return %c0_i32, %c0_i32_0 : i32, i32
  }
  func.func @transform_4(%arg0: i32) -> (i32, i32) {
    %c0_i32 = arith.constant 0 : i32
    %c0_i32_0 = arith.constant 0 : i32
    %c0_i32_1 = arith.constant 0 : i32
    return %c0_i32, %c0_i32_0 : i32, i32
  }
  func.func @transform_5(%arg0: i32) -> (i32, i32) {
    %c0_i32 = arith.constant 0 : i32
    %c0_i32_0 = arith.constant 0 : i32
    return %arg0, %c0_i32 : i32, i32
  }
}

</mosaic_0001>

<llo_original>
// kernel: tpu_custom_call.1
$region0: #{tpu_custom_call.1}
  #allocation0 [shape = 'u32[]', space=smem, size = 0x4, offset = 0x4, fixed_abs, tag = 'smem constant byte address 0x4 - core index']
  #allocation1 [shape = 'u32[72,128]{1,0:T(1,128)}', space=vmem, size = 0x9000, scoped, tag = 'internal scratch']
  %s0 = inlined_call_operand.vmem [shape: s32[16,3], index: 0, kind: input, shape index: {}]
  %s1 = inlined_call_operand.hbm [shape: f32[48,128], index: 1, kind: input, shape index: {}]
  %s2 = inlined_call_operand.vmem [shape: f32[16,128], index: 2, kind: input, shape index: {}]
  %s3 = inlined_call_operand.vmem [shape: f32[2,128], index: 3, kind: input, shape index: {}]
  %s4 = inlined_call_operand.vmem [shape: f32[2,128], index: 4, kind: input, shape index: {}]
  %s5 = inlined_call_operand.hbm [shape: f32[16,128], index: 5, kind: output, shape index: {}]
  %s6 = sld [smem:[#allocation0]]
  $region57: #{tpu_custom_call.1} parent=0
    _
  %s8 = ssub.s32 1, %s6
  %s9 = scalar_select 0, %s8, %s6
  $region1: #{tpu_custom_call.1} parent=0
    #allocation2 [shape = 'u8[24576]{0}', space=vmem, size = 0x6000, scoped, tag = 'input window, operand 1, single buffered']
    #allocation3 [shape = 's32[2]{0}', space=sflag, size = 0x8, scoped, tag = 'scoped memory for tpu_custom_call.1']
    #allocation4 [shape = 's32[2]{0}', space=sflag, size = 0x8, scoped, tag = 'scoped memory for tpu_custom_call.1']
    #allocation5 [shape = 'u8[8192]{0}', space=vmem, size = 0x2000, scoped, tag = 'output window, operand 0']
    %10 = vsyncpa [#allocation3], 0
    %11 = vsyncpa [#allocation4], 0
    %s12 = scalar_lea.sflag [#allocation4], 1
    %13 = vsyncpa %s12, 0
    loop: start=0, step=1, limit=4
    $region2: #{tpu_custom_call.1} parent=1 // loop_pre_header
      _
    $region3: #{tpu_custom_call.1} parent=1 // loop_header
      %s15 = sphi 0, %s19
      %p16 = scmp.ge.s32.totalorder %s15, 4
      %s25 = sphi 0, %s27
      %s28 = sphi 0, %s25
      %s29 = sphi 0, %s28
      %s45 = sphi 0, %s29
      %s49 = sphi 0, %s49
      %s51 = sphi 0, %s49
      %s52 = sphi 0, %s51
      %s66 = sphi 0, %s52
      %s70 = sphi 0, %s70
      %s72 = sphi 0, %s70
      %s73 = sphi 0, %s72
      %s87 = sphi 0, %s73
      %s91 = sphi 0, %s91
      %s93 = sphi 0, %s91
      %s94 = sphi 0, %s93
      %s108 = sphi 0, %s94
      %s112 = sphi 0, %s112
      %s114 = sphi 0, %s112
      %s115 = sphi 0, %s114
      %s129 = sphi 0, %s115
      %s135 = sphi 0, %s137
      %s138 = sphi 0, %s135
      %s139 = sphi 0, %s138
      %s155 = sphi 0, %s139
    $region4: #{tpu_custom_call.1} parent=1 // loop_header_branch
      %18 = sbr.rel (%p16) target = $region8
    $region5: #{tpu_custom_call.1} parent=1 // loop_body
      %s20 = ssub.s32 %s15, 1
      %s21 = ssub.s32 %s15, 2
      %s22 = sadd.s32 %s15, 1
      %s23 = ssub.s32 %s15, %s22
      %p24 = scmp.eq.s32.totalorder %s23, 0
      %s26 = sadd.s32 %s25, 1
      %s27 = scalar_select %p24, %s25, %s26
      %p30 = pneg %p24
      %p31 = scmp.eq.s32.totalorder %s15, 1
      %p32 = por %p30, %p31
      %p33 = scmp.ne.s32.totalorder %s25, %s28
      %p34 = scmp.eq.s32.totalorder %s15, 0
      %p35 = por %p33, %p34
      %p36 = scmp.ne.s32.totalorder %s25, %s28
      %p37 = scmp.eq.s32.totalorder %s20, 1
      %p38 = por %p36, %p37
      %p39 = scmp.ne.s32.totalorder %s28, %s29
      %p40 = scmp.eq.s32.totalorder %s20, 0
      %p41 = por %p39, %p40
      %p42 = scmp.ne.s32.totalorder %s28, %s29
      %p43 = scmp.eq.s32.totalorder %s21, 1
      %p44 = por %p42, %p43
      %p46 = scmp.ne.s32.totalorder %s29, %s45
      %p47 = scmp.eq.s32.totalorder %s21, 0
      %p48 = por %p46, %p47
      %s50 = sadd.s32 %s49, 1
      %p53 = scmp.eq.s32.totalorder %s15, 1
      %p54 = scmp.ne.s32.totalorder %s49, %s51
      %p55 = scmp.eq.s32.totalorder %s15, 0
      %p56 = por %p54, %p55
      %p57 = scmp.ne.s32.totalorder %s49, %s51
      %p58 = scmp.eq.s32.totalorder %s20, 1
      %p59 = por %p57, %p58
      %p60 = scmp.ne.s32.totalorder %s51, %s52
      %p61 = scmp.eq.s32.totalorder %s20, 0
      %p62 = por %p60, %p61
      %p63 = scmp.ne.s32.totalorder %s51, %s52
      %p64 = scmp.eq.s32.totalorder %s21, 1
      %p65 = por %p63, %p64
      %p67 = scmp.ne.s32.totalorder %s52, %s66
      %p68 = scmp.eq.s32.totalorder %s21, 0
      %p69 = por %p67, %p68
      %s71 = sadd.s32 %s70, 1
      %p74 = scmp.eq.s32.totalorder %s15, 1
      %p75 = scmp.ne.s32.totalorder %s70, %s72
      %p76 = scmp.eq.s32.totalorder %s15, 0
      %p77 = por %p75, %p76
      %p78 = scmp.ne.s32.totalorder %s70, %s72
      %p79 = scmp.eq.s32.totalorder %s20, 1
      %p80 = por %p78, %p79
      %p81 = scmp.ne.s32.totalorder %s72, %s73
      %p82 = scmp.eq.s32.totalorder %s20, 0
      %p83 = por %p81, %p82
      %p84 = scmp.ne.s32.totalorder %s72, %s73
      %p85 = scmp.eq.s32.totalorder %s21, 1
      %p86 = por %p84, %p85
      %p88 = scmp.ne.s32.totalorder %s73, %s87
      %p89 = scmp.eq.s32.totalorder %s21, 0
      %p90 = por %p88, %p89
      %s92 = sadd.s32 %s91, 1
      %p95 = scmp.eq.s32.totalorder %s15, 1
      %p96 = scmp.ne.s32.totalorder %s91, %s93
      %p97 = scmp.eq.s32.totalorder %s15, 0
      %p98 = por %p96, %p97
      %p99 = scmp.ne.s32.totalorder %s91, %s93
      %p100 = scmp.eq.s32.totalorder %s20, 1
      %p101 = por %p99, %p100
      %p102 = scmp.ne.s32.totalorder %s93, %s94
      %p103 = scmp.eq.s32.totalorder %s20, 0
      %p104 = por %p102, %p103
      %p105 = scmp.ne.s32.totalorder %s93, %s94
      %p106 = scmp.eq.s32.totalorder %s21, 1
      %p107 = por %p105, %p106
      %p109 = scmp.ne.s32.totalorder %s94, %s108
      %p110 = scmp.eq.s32.totalorder %s21, 0
      %p111 = por %p109, %p110
      %s113 = sadd.s32 %s112, 1
      %p116 = scmp.eq.s32.totalorder %s15, 1
      %p117 = scmp.ne.s32.totalorder %s112, %s114
      %p118 = scmp.eq.s32.totalorder %s15, 0
      %p119 = por %p117, %p118
      %p120 = scmp.ne.s32.totalorder %s112, %s114
      %p121 = scmp.eq.s32.totalorder %s20, 1
      %p122 = por %p120, %p121
      %p123 = scmp.ne.s32.totalorder %s114, %s115
      %p124 = scmp.eq.s32.totalorder %s20, 0
      %p125 = por %p123, %p124
      %p126 = scmp.ne.s32.totalorder %s114, %s115
      %p127 = scmp.eq.s32.totalorder %s21, 1
      %p128 = por %p126, %p127
      %p130 = scmp.ne.s32.totalorder %s115, %s129
      %p131 = scmp.eq.s32.totalorder %s21, 0
      %p132 = por %p130, %p131
      %s133 = ssub.s32 %s15, %s22
      %p134 = scmp.eq.s32.totalorder %s133, 0
      %s136 = sadd.s32 %s135, 1
      %s137 = scalar_select %p134, %s135, %s136
      %p140 = pneg %p134
      %p141 = scmp.eq.s32.totalorder %s15, 1
      %p142 = por %p140, %p141
      %p143 = scmp.ne.s32.totalorder %s135, %s138
      %p144 = scmp.eq.s32.totalorder %s15, 0
      %p145 = por %p143, %p144
      %p146 = scmp.ne.s32.totalorder %s135, %s138
      %p147 = scmp.eq.s32.totalorder %s20, 1
      %p148 = por %p146, %p147
      %p149 = scmp.ne.s32.totalorder %s138, %s139
      %p150 = scmp.eq.s32.totalorder %s20, 0
      %p151 = por %p149, %p150
      %p152 = scmp.ne.s32.totalorder %s138, %s139
      %p153 = scmp.eq.s32.totalorder %s21, 1
      %p154 = por %p152, %p153
      %p156 = scmp.ne.s32.totalorder %s139, %s155
      %p157 = scmp.eq.s32.totalorder %s21, 0
      %p158 = por %p156, %p157
      %p159 = scmp.le.s32.totalorder 1, %s15
      %p160 = scmp.lt.s32.totalorder %s15, 3
      %p161 = pnand %p159, %p160
      %p162 = pneg %p161
      // Predicated region
      $region9: #{tpu_custom_call.1} parent=5 // pred_check
        _
      $region10: #{tpu_custom_call.1} parent=5 // pred_check_branch
        %164 = sbr.rel (%p161) target = $region12
      $region11: #{tpu_custom_call.1} parent=5 // pred_region
        %s165 = ssub.s32 %s15, 1
        // Predicated region
        $region13: #{tpu_custom_call.1} parent=11 // pred_check
          %p166 = pneg %p62
        $region14: #{tpu_custom_call.1} parent=11 // pred_check_branch
          %168 = sbr.rel (%p166) target = $region16
        $region15: #{tpu_custom_call.1} parent=11 // pred_region
          %170 = vsyncadd [#allocation3], 0
          %s171 = sshll.u32 %s1, 4
          %s172 = int_to_ptr.hbm [resolvable:$true] %s171
          %s173 = sshll.u32 [#allocation2], 4
          %s174 = int_to_ptr.vmem [resolvable:$true] %s173
          %179 = dma.hbm_to_vmem [thread:$0]  %s172, 768, %s174, [#allocation3], 128, 128, 8
        $region16: #{tpu_custom_call.1} parent=11 // pred_fallthru
          _
        // Predicated region
        $region17: #{tpu_custom_call.1} parent=11 // pred_check
          %p180 = pneg %p83
        $region18: #{tpu_custom_call.1} parent=11 // pred_check_branch
          %182 = sbr.rel (%p180) target = $region20
        $region19: #{tpu_custom_call.1} parent=11 // pred_region
          _
        $region20: #{tpu_custom_call.1} parent=11 // pred_fallthru
          _
        // Predicated region
        $region21: #{tpu_custom_call.1} parent=11 // pred_check
          %p183 = pneg %p104
        $region22: #{tpu_custom_call.1} parent=11 // pred_check_branch
          %185 = sbr.rel (%p183) target = $region24
        $region23: #{tpu_custom_call.1} parent=11 // pred_region
          _
        $region24: #{tpu_custom_call.1} parent=11 // pred_fallthru
          _
        // Predicated region
        $region25: #{tpu_custom_call.1} parent=11 // pred_check
          %p186 = pneg %p125
        $region26: #{tpu_custom_call.1} parent=11 // pred_check_branch
          %188 = sbr.rel (%p186) target = $region28
        $region27: #{tpu_custom_call.1} parent=11 // pred_region
          _
        $region28: #{tpu_custom_call.1} parent=11 // pred_fallthru
          _
      $region12: #{tpu_custom_call.1} parent=5 // pred_fallthru
        _
      %p189 = scmp.lt.s32.totalorder %s15, 2
      // Predicated region
      $region29: #{tpu_custom_call.1} parent=5 // pred_check
        %p190 = pneg %p189
      $region30: #{tpu_custom_call.1} parent=5 // pred_check_branch
        %192 = sbr.rel (%p190) target = $region32
      $region31: #{tpu_custom_call.1} parent=5 // pred_region
        // Predicated region
        $region33: #{tpu_custom_call.1} parent=31 // pred_check
          %p193 = pneg %p35
        $region34: #{tpu_custom_call.1} parent=31 // pred_check_branch
          %195 = sbr.rel (%p193) target = $region36
        $region35: #{tpu_custom_call.1} parent=31 // pred_region
          %p196 = scmp.lt.s32.totalorder %s15, 1
          %s197 = scalar_select %p196, %s15, 1
          %s198 = smul.addr %s197, 8
          %s199 = scalar_lea.vmem %s0, %s198
        $region36: #{tpu_custom_call.1} parent=31 // pred_fallthru
          _
      $region32: #{tpu_custom_call.1} parent=5 // pred_fallthru
        _
      %p200 = scmp.le.s32.totalorder 1, %s15
      %p201 = scmp.lt.s32.totalorder %s15, 3
      %p202 = pnand %p200, %p201
      %p203 = pneg %p202
      // Predicated region
      $region37: #{tpu_custom_call.1} parent=5 // pred_check
        _
      $region38: #{tpu_custom_call.1} parent=5 // pred_check_branch
        %205 = sbr.rel (%p202) target = $region40
      $region39: #{tpu_custom_call.1} parent=5 // pred_region
        %s206 = ssub.s32 %s15, 1
        // Predicated region
        $region41: #{tpu_custom_call.1} parent=39 // pred_check
          %p207 = pneg %p62
        $region42: #{tpu_custom_call.1} parent=39 // pred_check_branch
          %209 = sbr.rel (%p207) target = $region44
        $region43: #{tpu_custom_call.1} parent=39 // pred_region
          %211 = dma.done [#allocation3], 768
        $region44: #{tpu_custom_call.1} parent=39 // pred_fallthru
          _
        %p212 = scmp.lt.s32.totalorder %s20, 1
        %s213 = scalar_select %p212, %s20, 1
        %s214 = smul.addr %s213, 8
        %s215 = scalar_lea.vmem %s0, %s214
        %p216 = pneg %p41
        %p217 = pneg %p38
        %p218 = pneg %p62
        %p219 = pneg %p59
        %p220 = pneg %p83
        %p221 = pneg %p80
        %p222 = pneg %p104
        %p223 = pneg %p101
        %p224 = pneg %p125
        %p225 = pneg %p122
        %p226 = pneg %p151
        %p227 = pneg %p148
        %s228 = sand.u32 %s138, 1
        %s229 = scalar_lea.sflag [#allocation4], %s228
        %s230 = sand.u32 %s138, 1
        %s231 = smul.addr %s230, 8
        %s232 = scalar_lea.vmem [#allocation5], %s231
        %p233 = scmp.lt.s32.totalorder %s20, 1
        %s234 = scalar_select %p233, %s20, 1
        %s235 = smul.addr %s234, 8
        %s236 = scalar_lea.vmem %s0, %s235
        %v237 = vld [vmem:[%s236] sm:$0xff]
        %v238 = vlaneseq
        %v239 = vand.u32 %v238, 127
        %240 = vset.pattern.permute.xlu0 0
        %241 = vperm.xlu0 %240, %v237
        %v242 = vpop.permute.xlu0 %241
        %vm243 = vcmp.eq.s32.totalorder %v239, %v242
        %v244 = vsel %vm243, 1, 0
        %v245 = vcvt.s32.f32 %v244
        %v246 = vld [vmem:[#allocation2] sm:$0xff]
        %v247 = vld [vmem:[#allocation2 + $0x8] sm:$0xff]
        %v248 = vld [vmem:[#allocation2 + $0x10] sm:$0xff]
        %v249 = vld [vmem:[#allocation2 + $0x18] sm:$0xff]
        %v250 = vld [vmem:[#allocation2 + $0x20] sm:$0xff]
        %v251 = vld [vmem:[#allocation2 + $0x28] sm:$0xff]
        %vm252 = vcmask 392192
        %v254 = vsel %vm252, %v245, 0
        %256 = vmatpush.msra.mxu0 0.0
        %257 = vmatpush.msra.mxu0 0.0
        %258 = vmatpush.msra.mxu0 0.0
        %259 = vmatpush.msra.mxu0 0.0
        %260 = vmatpush.msra.mxu0 0.0
        %261 = vmatpush.msra.mxu0 0.0
        %262 = vmatpush.msra.mxu0 0.0
        %263 = vmatpush.msra.mxu0 0.0
        %264 = vmatpush.msra.mxu0 0.0
        %265 = vmatpush.msra.mxu0 0.0
        %v266 = vand.u32 %v251, 4294901760
        %267 = vmatpush.msra.mxu0 %v266
        %v268 = vand.u32 %v250, 4294901760
        %269 = vmatpush.msra.mxu0 %v268
        %v270 = vand.u32 %v249, 4294901760
        %271 = vmatpush.msra.mxu0 %v270
        %v272 = vand.u32 %v248, 4294901760
        %273 = vmatpush.msra.mxu0 %v272
        %v274 = vand.u32 %v247, 4294901760
        %275 = vmatpush.msra.mxu0 %v274
        %v276 = vand.u32 %v246, 4294901760
        %277 = vmatpush.msra.mxu0 %v276
        %v278 = vand.u32 %v254, 4294901760
        %v279 = vsub.f32 %v254, %v278
        %v280 = vand.u32 %v279, 4294901760
        %v281 = vsub.f32 %v279, %v280
        %v282 = vand.u32 %v281, 4294901760
        %283 = vmatmul.f32.gmra.mxu0 %v282
        %v284 = vpop.f32.mrf.mxu0
        %v285 = vadd.f32 0.0, %v284
        %286 = vdwg.mxu0
        %287 = vmatpush.msra.mxu0 0.0
        %288 = vmatpush.msra.mxu0 0.0
        %289 = vmatpush.msra.mxu0 0.0
        %290 = vmatpush.msra.mxu0 0.0
        %291 = vmatpush.msra.mxu0 0.0
        %292 = vmatpush.msra.mxu0 0.0
        %293 = vmatpush.msra.mxu0 0.0
        %294 = vmatpush.msra.mxu0 0.0
        %295 = vmatpush.msra.mxu0 0.0
        %296 = vmatpush.msra.mxu0 0.0
        %v297 = vand.u32 %v251, 4294901760
        %v298 = vsub.f32 %v251, %v297
        %v299 = vand.u32 %v298, 4294901760
        %v300 = vsub.f32 %v298, %v299
        %v301 = vand.u32 %v300, 4294901760
        %302 = vmatpush.msra.mxu0 %v301
        %v303 = vand.u32 %v250, 4294901760
        %v304 = vsub.f32 %v250, %v303
        %v305 = vand.u32 %v304, 4294901760
        %v306 = vsub.f32 %v304, %v305
        %v307 = vand.u32 %v306, 4294901760
        %308 = vmatpush.msra.mxu0 %v307
        %v309 = vand.u32 %v249, 4294901760
        %v310 = vsub.f32 %v249, %v309
        %v311 = vand.u32 %v310, 4294901760
        %v312 = vsub.f32 %v310, %v311
        %v313 = vand.u32 %v312, 4294901760
        %314 = vmatpush.msra.mxu0 %v313
        %v315 = vand.u32 %v248, 4294901760
        %v316 = vsub.f32 %v248, %v315
        %v317 = vand.u32 %v316, 4294901760
        %v318 = vsub.f32 %v316, %v317
        %v319 = vand.u32 %v318, 4294901760
        %320 = vmatpush.msra.mxu0 %v319
        %v321 = vand.u32 %v247, 4294901760
        %v322 = vsub.f32 %v247, %v321
        %v323 = vand.u32 %v322, 4294901760
        %v324 = vsub.f32 %v322, %v323
        %v325 = vand.u32 %v324, 4294901760
        %326 = vmatpush.msra.mxu0 %v325
        %v327 = vand.u32 %v246, 4294901760
        %v328 = vsub.f32 %v246, %v327
        %v329 = vand.u32 %v328, 4294901760
        %v330 = vsub.f32 %v328, %v329
        %v331 = vand.u32 %v330, 4294901760
        %332 = vmatpush.msra.mxu0 %v331
        %v333 = vand.u32 %v254, 4294901760
        %334 = vmatmul.f32.gmra.mxu0 %v333
        %v335 = vpop.f32.mrf.mxu0
        %v336 = vadd.f32 %v285, %v335
        %337 = vdwg.mxu0
        %338 = vmatpush.msra.mxu0 0.0
        %339 = vmatpush.msra.mxu0 0.0
        %340 = vmatpush.msra.mxu0 0.0
        %341 = vmatpush.msra.mxu0 0.0
        %342 = vmatpush.msra.mxu0 0.0
        %343 = vmatpush.msra.mxu0 0.0
        %344 = vmatpush.msra.mxu0 0.0
        %345 = vmatpush.msra.mxu0 0.0
        %346 = vmatpush.msra.mxu0 0.0
        %347 = vmatpush.msra.mxu0 0.0
        %v348 = vand.u32 %v251, 4294901760
        %v349 = vsub.f32 %v251, %v348
        %350 = vmatpush.msra.mxu0 %v349
        %v351 = vand.u32 %v250, 4294901760
        %v352 = vsub.f32 %v250, %v351
        %353 = vmatpush.msra.mxu0 %v352
        %v354 = vand.u32 %v249, 4294901760
        %v355 = vsub.f32 %v249, %v354
        %356 = vmatpush.msra.mxu0 %v355
        %v357 = vand.u32 %v248, 4294901760
        %v358 = vsub.f32 %v248, %v357
        %359 = vmatpush.msra.mxu0 %v358
        %v360 = vand.u32 %v247, 4294901760
        %v361 = vsub.f32 %v247, %v360
        %362 = vmatpush.msra.mxu0 %v361
        %v363 = vand.u32 %v246, 4294901760
        %v364 = vsub.f32 %v246, %v363
        %365 = vmatpush.msra.mxu0 %v364
        %v366 = vand.u32 %v254, 4294901760
        %v367 = vsub.f32 %v254, %v366
        %368 = vmatmul.f32.gmra.mxu0 %v367
        %v369 = vpop.f32.mrf.mxu0
        %v370 = vadd.f32 %v336, %v369
        %371 = vdwg.mxu0
        %372 = vmatpush.msra.mxu0 0.0
        %373 = vmatpush.msra.mxu0 0.0
        %374 = vmatpush.msra.mxu0 0.0
        %375 = vmatpush.msra.mxu0 0.0
        %376 = vmatpush.msra.mxu0 0.0
        %377 = vmatpush.msra.mxu0 0.0
        %378 = vmatpush.msra.mxu0 0.0
        %379 = vmatpush.msra.mxu0 0.0
        %380 = vmatpush.msra.mxu0 0.0
        %381 = vmatpush.msra.mxu0 0.0
        %v382 = vand.u32 %v251, 4294901760
        %383 = vmatpush.msra.mxu0 %v382
        %v384 = vand.u32 %v250, 4294901760
        %385 = vmatpush.msra.mxu0 %v384
        %v386 = vand.u32 %v249, 4294901760
        %387 = vmatpush.msra.mxu0 %v386
        %v388 = vand.u32 %v248, 4294901760
        %389 = vmatpush.msra.mxu0 %v388
        %v390 = vand.u32 %v247, 4294901760
        %391 = vmatpush.msra.mxu0 %v390
        %v392 = vand.u32 %v246, 4294901760
        %393 = vmatpush.msra.mxu0 %v392
        %v394 = vand.u32 %v254, 4294901760
        %v395 = vsub.f32 %v254, %v394
        %v396 = vand.u32 %v395, 4294901760
        %397 = vmatmul.f32.gmra.mxu0 %v396
        %v398 = vpop.f32.mrf.mxu0
        %v399 = vadd.f32 %v370, %v398
        %400 = vdwg.mxu0
        %401 = vmatpush.msra.mxu0 0.0
        %402 = vmatpush.msra.mxu0 0.0
        %403 = vmatpush.msra.mxu0 0.0
        %404 = vmatpush.msra.mxu0 0.0
        %405 = vmatpush.msra.mxu0 0.0
        %406 = vmatpush.msra.mxu0 0.0
        %407 = vmatpush.msra.mxu0 0.0
        %408 = vmatpush.msra.mxu0 0.0
        %409 = vmatpush.msra.mxu0 0.0
        %410 = vmatpush.msra.mxu0 0.0
        %v411 = vand.u32 %v251, 4294901760
        %v412 = vsub.f32 %v251, %v411
        %v413 = vand.u32 %v412, 4294901760
        %414 = vmatpush.msra.mxu0 %v413
        %v415 = vand.u32 %v250, 4294901760
        %v416 = vsub.f32 %v250, %v415
        %v417 = vand.u32 %v416, 4294901760
        %418 = vmatpush.msra.mxu0 %v417
        %v419 = vand.u32 %v249, 4294901760
        %v420 = vsub.f32 %v249, %v419
        %v421 = vand.u32 %v420, 4294901760
        %422 = vmatpush.msra.mxu0 %v421
        %v423 = vand.u32 %v248, 4294901760
        %v424 = vsub.f32 %v248, %v423
        %v425 = vand.u32 %v424, 4294901760
        %426 = vmatpush.msra.mxu0 %v425
        %v427 = vand.u32 %v247, 4294901760
        %v428 = vsub.f32 %v247, %v427
        %v429 = vand.u32 %v428, 4294901760
        %430 = vmatpush.msra.mxu0 %v429
        %v431 = vand.u32 %v246, 4294901760
        %v432 = vsub.f32 %v246, %v431
        %v433 = vand.u32 %v432, 4294901760
        %434 = vmatpush.msra.mxu0 %v433
        %v435 = vand.u32 %v254, 4294901760
        %436 = vmatmul.f32.gmra.mxu0 %v435
        %v437 = vpop.f32.mrf.mxu0
        %v438 = vadd.f32 %v399, %v437
        %439 = vdwg.mxu0
        %440 = vmatpush.msra.mxu0 0.0
        %441 = vmatpush.msra.mxu0 0.0
        %442 = vmatpush.msra.mxu0 0.0
        %443 = vmatpush.msra.mxu0 0.0
        %444 = vmatpush.msra.mxu0 0.0
        %445 = vmatpush.msra.mxu0 0.0
        %446 = vmatpush.msra.mxu0 0.0
        %447 = vmatpush.msra.mxu0 0.0
        %448 = vmatpush.msra.mxu0 0.0
        %449 = vmatpush.msra.mxu0 0.0
        %v450 = vand.u32 %v251, 4294901760
        %451 = vmatpush.msra.mxu0 %v450
        %v452 = vand.u32 %v250, 4294901760
        %453 = vmatpush.msra.mxu0 %v452
        %v454 = vand.u32 %v249, 4294901760
        %455 = vmatpush.msra.mxu0 %v454
        %v456 = vand.u32 %v248, 4294901760
        %457 = vmatpush.msra.mxu0 %v456
        %v458 = vand.u32 %v247, 4294901760
        %459 = vmatpush.msra.mxu0 %v458
        %v460 = vand.u32 %v246, 4294901760
        %461 = vmatpush.msra.mxu0 %v460
        %v462 = vand.u32 %v254, 4294901760
        %463 = vmatmul.f32.gmra.mxu0 %v462
        %v464 = vpop.f32.mrf.mxu0
        %v465 = vadd.f32 %v438, %v464
        %466 = vdwg.mxu0
        %v467 = vmul.f32 %v465, 11.313708
        %468 = vset.pattern.permute.xlu0 1
        %469 = vperm.xlu0 %468, %v237
        %v470 = vpop.permute.xlu0 %469
        %vm471 = vcmp.eq.s32.totalorder %v239, %v470
        %v472 = vsel %vm471, 1, 0
        %v473 = vcvt.s32.f32 %v472
        %v474 = vld [vmem:[%s2] sm:$0xff]
        %v475 = vld [vmem:[%s2 + $0x8] sm:$0xff]
        %vm476 = vcmask 130048
        %v478 = vsel %vm476, %v473, 0
        %480 = vmatpush.msra.mxu0 0.0
        %481 = vmatpush.msra.mxu0 0.0
        %482 = vmatpush.msra.mxu0 0.0
        %483 = vmatpush.msra.mxu0 0.0
        %484 = vmatpush.msra.mxu0 0.0
        %485 = vmatpush.msra.mxu0 0.0
        %486 = vmatpush.msra.mxu0 0.0
        %487 = vmatpush.msra.mxu0 0.0
        %488 = vmatpush.msra.mxu0 0.0
        %489 = vmatpush.msra.mxu0 0.0
        %490 = vmatpush.msra.mxu0 0.0
        %491 = vmatpush.msra.mxu0 0.0
        %492 = vmatpush.msra.mxu0 0.0
        %493 = vmatpush.msra.mxu0 0.0
        %v494 = vand.u32 %v475, 4294901760
        %495 = vmatpush.msra.mxu0 %v494
        %v496 = vand.u32 %v474, 4294901760
        %497 = vmatpush.msra.mxu0 %v496
        %v498 = vand.u32 %v478, 4294901760
        %v499 = vsub.f32 %v478, %v498
        %v500 = vand.u32 %v499, 4294901760
        %v501 = vsub.f32 %v499, %v500
        %v502 = vand.u32 %v501, 4294901760
        %503 = vmatmul.f32.gmra.mxu0 %v502
        %v504 = vpop.f32.mrf.mxu0
        %v505 = vadd.f32 0.0, %v504
        %506 = vdwg.mxu0
        %507 = vmatpush.msra.mxu0 0.0
        %508 = vmatpush.msra.mxu0 0.0
        %509 = vmatpush.msra.mxu0 0.0
        %510 = vmatpush.msra.mxu0 0.0
        %511 = vmatpush.msra.mxu0 0.0
        %512 = vmatpush.msra.mxu0 0.0
        %513 = vmatpush.msra.mxu0 0.0
        %514 = vmatpush.msra.mxu0 0.0
        %515 = vmatpush.msra.mxu0 0.0
        %516 = vmatpush.msra.mxu0 0.0
        %517 = vmatpush.msra.mxu0 0.0
        %518 = vmatpush.msra.mxu0 0.0
        %519 = vmatpush.msra.mxu0 0.0
        %520 = vmatpush.msra.mxu0 0.0
        %v521 = vand.u32 %v475, 4294901760
        %v522 = vsub.f32 %v475, %v521
        %v523 = vand.u32 %v522, 4294901760
        %v524 = vsub.f32 %v522, %v523
        %v525 = vand.u32 %v524, 4294901760
        %526 = vmatpush.msra.mxu0 %v525
        %v527 = vand.u32 %v474, 4294901760
        %v528 = vsub.f32 %v474, %v527
        %v529 = vand.u32 %v528, 4294901760
        %v530 = vsub.f32 %v528, %v529
        %v531 = vand.u32 %v530, 4294901760
        %532 = vmatpush.msra.mxu0 %v531
        %v533 = vand.u32 %v478, 4294901760
        %534 = vmatmul.f32.gmra.mxu0 %v533
        %v535 = vpop.f32.mrf.mxu0
        %v536 = vadd.f32 %v505, %v535
        %537 = vdwg.mxu0
        %538 = vmatpush.msra.mxu0 0.0
        %539 = vmatpush.msra.mxu0 0.0
        %540 = vmatpush.msra.mxu0 0.0
        %541 = vmatpush.msra.mxu0 0.0
        %542 = vmatpush.msra.mxu0 0.0
        %543 = vmatpush.msra.mxu0 0.0
        %544 = vmatpush.msra.mxu0 0.0
        %545 = vmatpush.msra.mxu0 0.0
        %546 = vmatpush.msra.mxu0 0.0
        %547 = vmatpush.msra.mxu0 0.0
        %548 = vmatpush.msra.mxu0 0.0
        %549 = vmatpush.msra.mxu0 0.0
        %550 = vmatpush.msra.mxu0 0.0
        %551 = vmatpush.msra.mxu0 0.0
        %v552 = vand.u32 %v475, 4294901760
        %v553 = vsub.f32 %v475, %v552
        %554 = vmatpush.msra.mxu0 %v553
        %v555 = vand.u32 %v474, 4294901760
        %v556 = vsub.f32 %v474, %v555
        %557 = vmatpush.msra.mxu0 %v556
        %v558 = vand.u32 %v478, 4294901760
        %v559 = vsub.f32 %v478, %v558
        %560 = vmatmul.f32.gmra.mxu0 %v559
        %v561 = vpop.f32.mrf.mxu0
        %v562 = vadd.f32 %v536, %v561
        %563 = vdwg.mxu0
        %564 = vmatpush.msra.mxu0 0.0
        %565 = vmatpush.msra.mxu0 0.0
        %566 = vmatpush.msra.mxu0 0.0
        %567 = vmatpush.msra.mxu0 0.0
        %568 = vmatpush.msra.mxu0 0.0
        %569 = vmatpush.msra.mxu0 0.0
        %570 = vmatpush.msra.mxu0 0.0
        %571 = vmatpush.msra.mxu0 0.0
        %572 = vmatpush.msra.mxu0 0.0
        %573 = vmatpush.msra.mxu0 0.0
        %574 = vmatpush.msra.mxu0 0.0
        %575 = vmatpush.msra.mxu0 0.0
        %576 = vmatpush.msra.mxu0 0.0
        %577 = vmatpush.msra.mxu0 0.0
        %v578 = vand.u32 %v475, 4294901760
        %579 = vmatpush.msra.mxu0 %v578
        %v580 = vand.u32 %v474, 4294901760
        %581 = vmatpush.msra.mxu0 %v580
        %v582 = vand.u32 %v478, 4294901760
        %v583 = vsub.f32 %v478, %v582
        %v584 = vand.u32 %v583, 4294901760
        %585 = vmatmul.f32.gmra.mxu0 %v584
        %v586 = vpop.f32.mrf.mxu0
        %v587 = vadd.f32 %v562, %v586
        %588 = vdwg.mxu0
        %589 = vmatpush.msra.mxu0 0.0
        %590 = vmatpush.msra.mxu0 0.0
        %591 = vmatpush.msra.mxu0 0.0
        %592 = vmatpush.msra.mxu0 0.0
        %593 = vmatpush.msra.mxu0 0.0
        %594 = vmatpush.msra.mxu0 0.0
        %595 = vmatpush.msra.mxu0 0.0
        %596 = vmatpush.msra.mxu0 0.0
        %597 = vmatpush.msra.mxu0 0.0
        %598 = vmatpush.msra.mxu0 0.0
        %599 = vmatpush.msra.mxu0 0.0
        %600 = vmatpush.msra.mxu0 0.0
        %601 = vmatpush.msra.mxu0 0.0
        %602 = vmatpush.msra.mxu0 0.0
        %v603 = vand.u32 %v475, 4294901760
        %v604 = vsub.f32 %v475, %v603
        %v605 = vand.u32 %v604, 4294901760
        %606 = vmatpush.msra.mxu0 %v605
        %v607 = vand.u32 %v474, 4294901760
        %v608 = vsub.f32 %v474, %v607
        %v609 = vand.u32 %v608, 4294901760
        %610 = vmatpush.msra.mxu0 %v609
        %v611 = vand.u32 %v478, 4294901760
        %612 = vmatmul.f32.gmra.mxu0 %v611
        %v613 = vpop.f32.mrf.mxu0
        %v614 = vadd.f32 %v587, %v613
        %615 = vdwg.mxu0
        %616 = vmatpush.msra.mxu0 0.0
        %617 = vmatpush.msra.mxu0 0.0
        %618 = vmatpush.msra.mxu0 0.0
        %619 = vmatpush.msra.mxu0 0.0
        %620 = vmatpush.msra.mxu0 0.0
        %621 = vmatpush.msra.mxu0 0.0
        %622 = vmatpush.msra.mxu0 0.0
        %623 = vmatpush.msra.mxu0 0.0
        %624 = vmatpush.msra.mxu0 0.0
        %625 = vmatpush.msra.mxu0 0.0
        %626 = vmatpush.msra.mxu0 0.0
        %627 = vmatpush.msra.mxu0 0.0
        %628 = vmatpush.msra.mxu0 0.0
        %629 = vmatpush.msra.mxu0 0.0
        %v630 = vand.u32 %v475, 4294901760
        %631 = vmatpush.msra.mxu0 %v630
        %v632 = vand.u32 %v474, 4294901760
        %633 = vmatpush.msra.mxu0 %v632
        %v634 = vand.u32 %v478, 4294901760
        %635 = vmatmul.f32.gmra.mxu0 %v634
        %v636 = vpop.f32.mrf.mxu0
        %v637 = vadd.f32 %v614, %v636
        %638 = vdwg.mxu0
        %v639 = vadd.f32 %v467, %v637
        %v640 = vld [vmem:[%s3] sm:$0x3]
        %v641 = vperm.slane %v640, 0
        %vm642 = vcmp.eq.s32.totalorder %v237, 1
        %v643 = vsel %vm642, 1, 0
        %644 = vset.pattern.permute.xlu0 2
        %645 = vperm.xlu0 %644, %v643
        %v646 = vpop.permute.xlu0 %645
        %vm647 = vcmp.eq.s32.totalorder %v646, 1
        %v648 = vperm.slane %v640, 1
        %v649 = vsel %vm647, %v648, %v641
        %v650 = vadd.f32 %v639, %v649
        %651 = vadd.xlane.f32.xlu0 %v650
        %v652 = vpop.xlane.xlu0 %651
        %v653 = vrcp.pop 128.0
        %v654 = vmul.f32 128.0, %v653
        %v655 = vsub.f32 1.0, %v654
        %v656 = vmul.f32 %v653, %v655
        %v657 = vadd.f32 %v653, %v656
        %vm658 = vweird.f32 %v653
        %v659 = vsel %vm658, %v653, %v657
        %v660 = vmul.f32 %v652, %v659
        %v661 = vsub.f32 %v650, %v660
        %v662 = vmul.f32 %v661, %v661
        %663 = vadd.xlane.f32.xlu0 %v662
        %v664 = vpop.xlane.xlu0 %663
        %v665 = vmul.f32 %v664, %v659
        %v666 = vadd.f32 %v665, 1e-06
        %v667 = vrsqrt.pop %v666
        %v668 = vmul.f32 %v667, %v666
        %v669 = vmul.f32 %v668, %v667
        %v670 = vmul.f32 0.5, %v669
        %v671 = vsub.f32 1.5, %v670
        %v672 = vmul.f32 %v667, %v671
        %vm673 = vweird.f32 %v666
        %vm674 = vweird.f32 %v667
        %vm675 = vmor %vm673, %vm674
        %v676 = vsel %vm675, %v667, %v672
        %v677 = vmul.f32 %v661, %v676
        %v678 = vld [vmem:[%s4] sm:$0x1]
        %v679 = vld [vmem:[%s4 + $0x1] sm:$0x1]
        %v680 = vperm.slane %v678, 0
        %v681 = vmul.f32 %v677, %v680
        %v682 = vperm.slane %v679, 0
        %v683 = vadd.f32 %v681, %v682
        %684 = vst [vmem:[%s232] sm:$0xff] %v683
        %s685 = sand.u32 %s138, 1
        %s686 = scalar_lea.sflag [#allocation4], %s685
        %s687 = sand.u32 %s138, 1
        %s688 = smul.addr %s687, 8
        %s689 = scalar_lea.vmem [#allocation5], %s688
        // Predicated region
        $region45: #{tpu_custom_call.1} parent=39 // pred_check
          %p690 = pneg %p148
        $region46: #{tpu_custom_call.1} parent=39 // pred_check_branch
          %692 = sbr.rel (%p690) target = $region48
        $region47: #{tpu_custom_call.1} parent=39 // pred_region
          %694 = vsyncadd %s686, 0
          %s695 = smul.addr %s20, 8
          %s696 = scalar_lea.hbm %s5, %s695
          %s698 = sshll.u32 %s689, 4
          %s699 = int_to_ptr.vmem [resolvable:$true] %s698
          %s700 = sshll.u32 %s696, 4
          %s701 = int_to_ptr.hbm [resolvable:$true] %s700
          %703 = dma.vmem_to_hbm [thread:$0]  %s699, 128, %s701, %s686
        $region48: #{tpu_custom_call.1} parent=39 // pred_fallthru
          _
      $region40: #{tpu_custom_call.1} parent=5 // pred_fallthru
        _
      %p704 = scmp.le.s32.totalorder 2, %s15
      // Predicated region
      $region49: #{tpu_custom_call.1} parent=5 // pred_check
        %p705 = pneg %p704
      $region50: #{tpu_custom_call.1} parent=5 // pred_check_branch
        %707 = sbr.rel (%p705) target = $region52
      $region51: #{tpu_custom_call.1} parent=5 // pred_region
        %s708 = ssub.s32 %s15, 2
        // Predicated region
        $region53: #{tpu_custom_call.1} parent=51 // pred_check
          %p709 = pneg %p154
        $region54: #{tpu_custom_call.1} parent=51 // pred_check_branch
          %711 = sbr.rel (%p709) target = $region56
        $region55: #{tpu_custom_call.1} parent=51 // pred_region
          %s712 = sand.u32 %s139, 1
          %s713 = scalar_lea.sflag [#allocation4], %s712
          %s714 = sand.u32 %s139, 1
          %s715 = smul.addr %s714, 8
          %s716 = scalar_lea.vmem [#allocation5], %s715
          %718 = dma.done %s713, 128
        $region56: #{tpu_custom_call.1} parent=51 // pred_fallthru
          _
      $region52: #{tpu_custom_call.1} parent=5 // pred_fallthru
        _
    $region6: #{tpu_custom_call.1} parent=1 // loop_footer
      %s19 = sadd.s32 1, %s15
    $region7: #{tpu_custom_call.1} parent=1 // loop_footer_branch
      %14 = sbr.rel target = $region3
    $region8: #{tpu_custom_call.1} parent=1 // loop_exit
      _
    %719 = vsyncpa [#allocation3], 1
    %s720 = scalar_lea.sflag [#allocation3], 1
    %721 = vsyncpa %s720, 1
    %722 = vsyncpa [#allocation4], 1
    %s723 = scalar_lea.sflag [#allocation4], 1
    %724 = vsyncpa %s723, 1

// kernel: tpu_custom_call.1
$region0: #{tpu_custom_call.1}
  #allocation0 [shape = 'u32[]', space=smem, size = 0x4, offset = 0x4, fixed_abs, tag = 'smem constant byte address 0x4 - core index']
  #allocation1 [shape = 'u32[72,128]{1,0:T(1,128)}', space=vmem, size = 0x9000, scoped, tag = 'internal scratch']
  %s0 = inlined_call_operand.vmem [shape: s32[16,3], index: 0, kind: input, shape index: {}]
  %s1 = inlined_call_operand.hbm [shape: f32[48,128], index: 1, kind: input, shape index: {}]
  %s2 = inlined_call_operand.vmem [shape: f32[16,128], index: 2, kind: input, shape index: {}]
  %s3 = inlined_call_operand.vmem [shape: f32[2,128], index: 3, kind: input, shape index: {}]
  %s4 = inlined_call_operand.vmem [shape: f32[2,128], index: 4, kind: input, shape index: {}]
  %s5 = inlined_call_operand.hbm [shape: f32[16,128], index: 5, kind: output, shape index: {}]
  %s6 = sld [smem:[#allocation0]]
  $region57: #{tpu_custom_call.1} parent=0
    _
  %s8 = ssub.s32 1, %s6
  %s9 = scalar_select 0, %s8, %s6
  $region1: #{tpu_custom_call.1} parent=0
    #allocation2 [shape = 'u8[24576]{0}', space=vmem, size = 0x6000, scoped, tag = 'input window, operand 1, single buffered']
    #allocation3 [shape = 's32[2]{0}', space=sflag, size = 0x8, scoped, tag = 'scoped memory for tpu_custom_call.1']
    #allocation4 [shape = 's32[2]{0}', space=sflag, size = 0x8, scoped, tag = 'scoped memory for tpu_custom_call.1']
    #allocation5 [shape = 'u8[8192]{0}', space=vmem, size = 0x2000, scoped, tag = 'output window, operand 0']
    %10 = vsyncpa [#allocation3], 0
    %11 = vsyncpa [#allocation4], 0
    %s12 = scalar_lea.sflag [#allocation4], 1
    %13 = vsyncpa %s12, 0
    loop: start=0, step=1, limit=4
    $region2: #{tpu_custom_call.1} parent=1 // loop_pre_header
      _
    $region3: #{tpu_custom_call.1} parent=1 // loop_header
      %s15 = sphi 0, %s19
      %p16 = scmp.ge.s32.totalorder %s15, 4
      %s25 = sphi 0, %s27
      %s28 = sphi 0, %s25
      %s29 = sphi 0, %s28
      %s45 = sphi 0, %s29
      %s49 = sphi 0, %s49
      %s51 = sphi 0, %s49
      %s52 = sphi 0, %s51
      %s66 = sphi 0, %s52
      %s70 = sphi 0, %s70
      %s72 = sphi 0, %s70
      %s73 = sphi 0, %s72
      %s87 = sphi 0, %s73
      %s91 = sphi 0, %s91
      %s93 = sphi 0, %s91
      %s94 = sphi 0, %s93
      %s108 = sphi 0, %s94
      %s112 = sphi 0, %s112
      %s114 = sphi 0, %s112
      %s115 = sphi 0, %s114
      %s129 = sphi 0, %s115
      %s135 = sphi 0, %s137
      %s138 = sphi 0, %s135
      %s139 = sphi 0, %s138
      %s155 = sphi 0, %s139
    $region4: #{tpu_custom_call.1} parent=1 // loop_header_branch
      %18 = sbr.rel (%p16) target = $region8
    $region5: #{tpu_custom_call.1} parent=1 // loop_body
      %s20 = ssub.s32 %s15, 1
      %s21 = ssub.s32 %s15, 2
      %s22 = sadd.s32 %s15, 1
      %s23 = ssub.s32 %s15, %s22
      %p24 = scmp.eq.s32.totalorder %s23, 0
      %s26 = sadd.s32 %s25, 1
      %s27 = scalar_select %p24, %s25, %s26
      %p30 = pneg %p24
      %p31 = scmp.eq.s32.totalorder %s15, 1
      %p32 = por %p30, %p31
      %p33 = scmp.ne.s32.totalorder %s25, %s28
      %p34 = scmp.eq.s32.totalorder %s15, 0
      %p35 = por %p33, %p34
      %p36 = scmp.ne.s32.totalorder %s25, %s28
      %p37 = scmp.eq.s32.totalorder %s20, 1
      %p38 = por %p36, %p37
      %p39 = scmp.ne.s32.totalorder %s28, %s29
      %p40 = scmp.eq.s32.totalorder %s20, 0
      %p41 = por %p39, %p40
      %p42 = scmp.ne.s32.totalorder %s28, %s29
      %p43 = scmp.eq.s32.totalorder %s21, 1
      %p44 = por %p42, %p43
      %p46 = scmp.ne.s32.totalorder %s29, %s45
      %p47 = scmp.eq.s32.totalorder %s21, 0
      %p48 = por %p46, %p47
      %s50 = sadd.s32 %s49, 1
      %p53 = scmp.eq.s32.totalorder %s15, 1
      %p54 = scmp.ne.s32.totalorder %s49, %s51
      %p55 = scmp.eq.s32.totalorder %s15, 0
      %p56 = por %p54, %p55
      %p57 = scmp.ne.s32.totalorder %s49, %s51
      %p58 = scmp.eq.s32.totalorder %s20, 1
      %p59 = por %p57, %p58
      %p60 = scmp.ne.s32.totalorder %s51, %s52
      %p61 = scmp.eq.s32.totalorder %s20, 0
      %p62 = por %p60, %p61
      %p63 = scmp.ne.s32.totalorder %s51, %s52
      %p64 = scmp.eq.s32.totalorder %s21, 1
      %p65 = por %p63, %p64
      %p67 = scmp.ne.s32.totalorder %s52, %s66
      %p68 = scmp.eq.s32.totalorder %s21, 0
      %p69 = por %p67, %p68
      %s71 = sadd.s32 %s70, 1
      %p74 = scmp.eq.s32.totalorder %s15, 1
      %p75 = scmp.ne.s32.totalorder %s70, %s72
      %p76 = scmp.eq.s32.totalorder %s15, 0
      %p77 = por %p75, %p76
      %p78 = scmp.ne.s32.totalorder %s70, %s72
      %p79 = scmp.eq.s32.totalorder %s20, 1
      %p80 = por %p78, %p79
      %p81 = scmp.ne.s32.totalorder %s72, %s73
      %p82 = scmp.eq.s32.totalorder %s20, 0
      %p83 = por %p81, %p82
      %p84 = scmp.ne.s32.totalorder %s72, %s73
      %p85 = scmp.eq.s32.totalorder %s21, 1
      %p86 = por %p84, %p85
      %p88 = scmp.ne.s32.totalorder %s73, %s87
      %p89 = scmp.eq.s32.totalorder %s21, 0
      %p90 = por %p88, %p89
      %s92 = sadd.s32 %s91, 1
      %p95 = scmp.eq.s32.totalorder %s15, 1
      %p96 = scmp.ne.s32.totalorder %s91, %s93
      %p97 = scmp.eq.s32.totalorder %s15, 0
      %p98 = por %p96, %p97
      %p99 = scmp.ne.s32.totalorder %s91, %s93
      %p100 = scmp.eq.s32.totalorder %s20, 1
      %p101 = por %p99, %p100
      %p102 = scmp.ne.s32.totalorder %s93, %s94
      %p103 = scmp.eq.s32.totalorder %s20, 0
      %p104 = por %p102, %p103
      %p105 = scmp.ne.s32.totalorder %s93, %s94
      %p106 = scmp.eq.s32.totalorder %s21, 1
      %p107 = por %p105, %p106
      %p109 = scmp.ne.s32.totalorder %s94, %s108
      %p110 = scmp.eq.s32.totalorder %s21, 0
      %p111 = por %p109, %p110
      %s113 = sadd.s32 %s112, 1
      %p116 = scmp.eq.s32.totalorder %s15, 1
      %p117 = scmp.ne.s32.totalorder %s112, %s114
      %p118 = scmp.eq.s32.totalorder %s15, 0
      %p119 = por %p117, %p118
      %p120 = scmp.ne.s32.totalorder %s112, %s114
      %p121 = scmp.eq.s32.totalorder %s20, 1
      %p122 = por %p120, %p121
      %p123 = scmp.ne.s32.totalorder %s114, %s115
      %p124 = scmp.eq.s32.totalorder %s20, 0
      %p125 = por %p123, %p124
      %p126 = scmp.ne.s32.totalorder %s114, %s115
      %p127 = scmp.eq.s32.totalorder %s21, 1
      %p128 = por %p126, %p127
      %p130 = scmp.ne.s32.totalorder %s115, %s129
      %p131 = scmp.eq.s32.totalorder %s21, 0
      %p132 = por %p130, %p131
      %s133 = ssub.s32 %s15, %s22
      %p134 = scmp.eq.s32.totalorder %s133, 0
      %s136 = sadd.s32 %s135, 1
      %s137 = scalar_select %p134, %s135, %s136
      %p140 = pneg %p134
      %p141 = scmp.eq.s32.totalorder %s15, 1
      %p142 = por %p140, %p141
      %p143 = scmp.ne.s32.totalorder %s135, %s138
      %p144 = scmp.eq.s32.totalorder %s15, 0
      %p145 = por %p143, %p144
      %p146 = scmp.ne.s32.totalorder %s135, %s138
      %p147 = scmp.eq.s32.totalorder %s20, 1
      %p148 = por %p146, %p147
      %p149 = scmp.ne.s32.totalorder %s138, %s139
      %p150 = scmp.eq.s32.totalorder %s20, 0
      %p151 = por %p149, %p150
      %p152 = scmp.ne.s32.totalorder %s138, %s139
      %p153 = scmp.eq.s32.totalorder %s21, 1
      %p154 = por %p152, %p153
      %p156 = scmp.ne.s32.totalorder %s139, %s155
      %p157 = scmp.eq.s32.totalorder %s21, 0
      %p158 = por %p156, %p157
      %p159 = scmp.le.s32.totalorder 1, %s15
      %p160 = scmp.lt.s32.totalorder %s15, 3
      %p161 = pnand %p159, %p160
      %p162 = pneg %p161
      // Predicated region
      $region9: #{tpu_custom_call.1} parent=5 // pred_check
        _
      $region10: #{tpu_custom_call.1} parent=5 // pred_check_branch
        %164 = sbr.rel (%p161) target = $region12
      $region11: #{tpu_custom_call.1} parent=5 // pred_region
        %s165 = ssub.s32 %s15, 1
        // Predicated region
        $region13: #{tpu_custom_call.1} parent=11 // pred_check
          %p166 = pneg %p62
        $region14: #{tpu_custom_call.1} parent=11 // pred_check_branch
          %168 = sbr.rel (%p166) target = $region16
        $region15: #{tpu_custom_call.1} parent=11 // pred_region
          %170 = vsyncadd [#allocation3], 0
          %s171 = sshll.u32 %s1, 4
          %s172 = int_to_ptr.hbm [resolvable:$true] %s171
          %s173 = sshll.u32 [#allocation2], 4
          %s174 = int_to_ptr.vmem [resolvable:$true] %s173
          %179 = dma.hbm_to_vmem [thread:$0]  %s172, 768, %s174, [#allocation3], 128, 128, 8
        $region16: #{tpu_custom_call.1} parent=11 // pred_fallthru
          _
        // Predicated region
        $region17: #{tpu_custom_call.1} parent=11 // pred_check
          %p180 = pneg %p83
        $region18: #{tpu_custom_call.1} parent=11 // pred_check_branch
          %182 = sbr.rel (%p180) target = $region20
        $region19: #{tpu_custom_call.1} parent=11 // pred_region
          _
        $region20: #{tpu_custom_call.1} parent=11 // pred_fallthru
          _
        // Predicated region
        $region21: #{tpu_custom_call.1} parent=11 // pred_check
          %p183 = pneg %p104
        $region22: #{tpu_custom_call.1} parent=11 // pred_check_branch
          %185 = sbr.rel (%p183) target = $region24
        $region23: #{tpu_custom_call.1} parent=11 // pred_region
          _
        $region24: #{tpu_custom_call.1} parent=11 // pred_fallthru
          _
        // Predicated region
        $region25: #{tpu_custom_call.1} parent=11 // pred_check
          %p186 = pneg %p125
        $region26: #{tpu_custom_call.1} parent=11 // pred_check_branch
          %188 = sbr.rel (%p186) target = $region28
        $region27: #{tpu_custom_call.1} parent=11 // pred_region
          _
        $region28: #{tpu_custom_call.1} parent=11 // pred_fallthru
          _
      $region12: #{tpu_custom_call.1} parent=5 // pred_fallthru
        _
      %p189 = scmp.lt.s32.totalorder %s15, 2
      // Predicated region
      $region29: #{tpu_custom_call.1} parent=5 // pred_check
        %p190 = pneg %p189
      $region30: #{tpu_custom_call.1} parent=5 // pred_check_branch
        %192 = sbr.rel (%p190) target = $region32
      $region31: #{tpu_custom_call.1} parent=5 // pred_region
        // Predicated region
        $region33: #{tpu_custom_call.1} parent=31 // pred_check
          %p193 = pneg %p35
        $region34: #{tpu_custom_call.1} parent=31 // pred_check_branch
          %195 = sbr.rel (%p193) target = $region36
        $region35: #{tpu_custom_call.1} parent=31 // pred_region
          %p196 = scmp.lt.s32.totalorder %s15, 1
          %s197 = scalar_select %p196, %s15, 1
          %s198 = smul.addr %s197, 8
          %s199 = scalar_lea.vmem %s0, %s198
        $region36: #{tpu_custom_call.1} parent=31 // pred_fallthru
          _
      $region32: #{tpu_custom_call.1} parent=5 // pred_fallthru
        _
      %p200 = scmp.le.s32.totalorder 1, %s15
      %p201 = scmp.lt.s32.totalorder %s15, 3
      %p202 = pnand %p200, %p201
      %p203 = pneg %p202
      // Predicated region
      $region37: #{tpu_custom_call.1} parent=5 // pred_check
        _
      $region38: #{tpu_custom_call.1} parent=5 // pred_check_branch
        %205 = sbr.rel (%p202) target = $region40
      $region39: #{tpu_custom_call.1} parent=5 // pred_region
        %s206 = ssub.s32 %s15, 1
        // Predicated region
        $region41: #{tpu_custom_call.1} parent=39 // pred_check
          %p207 = pneg %p62
        $region42: #{tpu_custom_call.1} parent=39 // pred_check_branch
          %209 = sbr.rel (%p207) target = $region44
        $region43: #{tpu_custom_call.1} parent=39 // pred_region
          %211 = dma.done [#allocation3], 768
        $region44: #{tpu_custom_call.1} parent=39 // pred_fallthru
          _
        %p212 = scmp.lt.s32.totalorder %s20, 1
        %s213 = scalar_select %p212, %s20, 1
        %s214 = smul.addr %s213, 8
        %s215 = scalar_lea.vmem %s0, %s214
        %p216 = pneg %p41
        %p217 = pneg %p38
        %p218 = pneg %p62
        %p219 = pneg %p59
        %p220 = pneg %p83
        %p221 = pneg %p80
        %p222 = pneg %p104
        %p223 = pneg %p101
        %p224 = pneg %p125
        %p225 = pneg %p122
        %p226 = pneg %p151
        %p227 = pneg %p148
        %s228 = sand.u32 %s138, 1
        %s229 = scalar_lea.sflag [#allocation4], %s228
        %s230 = sand.u32 %s138, 1
        %s231 = smul.addr %s230, 8
        %s232 = scalar_lea.vmem [#allocation5], %s231
        %p233 = scmp.lt.s32.totalorder %s20, 1
        %s234 = scalar_select %p233, %s20, 1
        %s235 = smul.addr %s234, 8
        %s236 = scalar_lea.vmem %s0, %s235
        %v237 = vld [vmem:[%s236] sm:$0xff]
        %v238 = vlaneseq
        %v239 = vand.u32 %v238, 127
        %240 = vset.pattern.permute.xlu0 0
        %241 = vperm.xlu0 %240, %v237
        %v242 = vpop.permute.xlu0 %241
        %vm243 = vcmp.eq.s32.totalorder %v239, %v242
        %v244 = vsel %vm243, 1, 0
        %v245 = vcvt.s32.f32 %v244
        %v246 = vld [vmem:[#allocation2] sm:$0xff]
        %v247 = vld [vmem:[#allocation2 + $0x8] sm:$0xff]
        %v248 = vld [vmem:[#allocation2 + $0x10] sm:$0xff]
        %v249 = vld [vmem:[#allocation2 + $0x18] sm:$0xff]
        %v250 = vld [vmem:[#allocation2 + $0x20] sm:$0xff]
        %v251 = vld [vmem:[#allocation2 + $0x28] sm:$0xff]
        %vm252 = vcmask 392192
        %v254 = vsel %vm252, %v245, 0
        %256 = vmatpush.msra.mxu0 0.0
        %257 = vmatpush.msra.mxu0 0.0
        %258 = vmatpush.msra.mxu0 0.0
        %259 = vmatpush.msra.mxu0 0.0
        %260 = vmatpush.msra.mxu0 0.0
        %261 = vmatpush.msra.mxu0 0.0
        %262 = vmatpush.msra.mxu0 0.0
        %263 = vmatpush.msra.mxu0 0.0
        %264 = vmatpush.msra.mxu0 0.0
        %265 = vmatpush.msra.mxu0 0.0
        %v266 = vand.u32 %v251, 4294901760
        %267 = vmatpush.msra.mxu0 %v266
        %v268 = vand.u32 %v250, 4294901760
        %269 = vmatpush.msra.mxu0 %v268
        %v270 = vand.u32 %v249, 4294901760
        %271 = vmatpush.msra.mxu0 %v270
        %v272 = vand.u32 %v248, 4294901760
        %273 = vmatpush.msra.mxu0 %v272
        %v274 = vand.u32 %v247, 4294901760
        %275 = vmatpush.msra.mxu0 %v274
        %v276 = vand.u32 %v246, 4294901760
        %277 = vmatpush.msra.mxu0 %v276
        %v278 = vand.u32 %v254, 4294901760
        %v279 = vsub.f32 %v254, %v278
        %v280 = vand.u32 %v279, 4294901760
        %v281 = vsub.f32 %v279, %v280
        %v282 = vand.u32 %v281, 4294901760
        %283 = vmatmul.f32.gmra.mxu0 %v282
        %v284 = vpop.f32.mrf.mxu0
        %v285 = vadd.f32 0.0, %v284
        %286 = vdwg.mxu0
        %287 = vmatpush.msra.mxu0 0.0
        %288 = vmatpush.msra.mxu0 0.0
        %289 = vmatpush.msra.mxu0 0.0
        %290 = vmatpush.msra.mxu0 0.0
        %291 = vmatpush.msra.mxu0 0.0
        %292 = vmatpush.msra.mxu0 0.0
        %293 = vmatpush.msra.mxu0 0.0
        %294 = vmatpush.msra.mxu0 0.0
        %295 = vmatpush.msra.mxu0 0.0
        %296 = vmatpush.msra.mxu0 0.0
        %v297 = vand.u32 %v251, 4294901760
        %v298 = vsub.f32 %v251, %v297
        %v299 = vand.u32 %v298, 4294901760
        %v300 = vsub.f32 %v298, %v299
        %v301 = vand.u32 %v300, 4294901760
        %302 = vmatpush.msra.mxu0 %v301
        %v303 = vand.u32 %v250, 4294901760
        %v304 = vsub.f32 %v250, %v303
        %v305 = vand.u32 %v304, 4294901760
        %v306 = vsub.f32 %v304, %v305
        %v307 = vand.u32 %v306, 4294901760
        %308 = vmatpush.msra.mxu0 %v307
        %v309 = vand.u32 %v249, 4294901760
        %v310 = vsub.f32 %v249, %v309
        %v311 = vand.u32 %v310, 4294901760
        %v312 = vsub.f32 %v310, %v311
        %v313 = vand.u32 %v312, 4294901760
        %314 = vmatpush.msra.mxu0 %v313
        %v315 = vand.u32 %v248, 4294901760
        %v316 = vsub.f32 %v248, %v315
        %v317 = vand.u32 %v316, 4294901760
        %v318 = vsub.f32 %v316, %v317
        %v319 = vand.u32 %v318, 4294901760
        %320 = vmatpush.msra.mxu0 %v319
        %v321 = vand.u32 %v247, 4294901760
        %v322 = vsub.f32 %v247, %v321
        %v323 = vand.u32 %v322, 4294901760
        %v324 = vsub.f32 %v322, %v323
        %v325 = vand.u32 %v324, 4294901760
        %326 = vmatpush.msra.mxu0 %v325
        %v327 = vand.u32 %v246, 4294901760
        %v328 = vsub.f32 %v246, %v327
        %v329 = vand.u32 %v328, 4294901760
        %v330 = vsub.f32 %v328, %v329
        %v331 = vand.u32 %v330, 4294901760
        %332 = vmatpush.msra.mxu0 %v331
        %v333 = vand.u32 %v254, 4294901760
        %334 = vmatmul.f32.gmra.mxu0 %v333
        %v335 = vpop.f32.mrf.mxu0
        %v336 = vadd.f32 %v285, %v335
        %337 = vdwg.mxu0
        %338 = vmatpush.msra.mxu0 0.0
        %339 = vmatpush.msra.mxu0 0.0
        %340 = vmatpush.msra.mxu0 0.0
        %341 = vmatpush.msra.mxu0 0.0
        %342 = vmatpush.msra.mxu0 0.0
        %343 = vmatpush.msra.mxu0 0.0
        %344 = vmatpush.msra.mxu0 0.0
        %345 = vmatpush.msra.mxu0 0.0
        %346 = vmatpush.msra.mxu0 0.0
        %347 = vmatpush.msra.mxu0 0.0
        %v348 = vand.u32 %v251, 4294901760
        %v349 = vsub.f32 %v251, %v348
        %350 = vmatpush.msra.mxu0 %v349
        %v351 = vand.u32 %v250, 4294901760
        %v352 = vsub.f32 %v250, %v351
        %353 = vmatpush.msra.mxu0 %v352
        %v354 = vand.u32 %v249, 4294901760
        %v355 = vsub.f32 %v249, %v354
        %356 = vmatpush.msra.mxu0 %v355
        %v357 = vand.u32 %v248, 4294901760
        %v358 = vsub.f32 %v248, %v357
        %359 = vmatpush.msra.mxu0 %v358
        %v360 = vand.u32 %v247, 4294901760
        %v361 = vsub.f32 %v247, %v360
        %362 = vmatpush.msra.mxu0 %v361
        %v363 = vand.u32 %v246, 4294901760
        %v364 = vsub.f32 %v246, %v363
        %365 = vmatpush.msra.mxu0 %v364
        %v366 = vand.u32 %v254, 4294901760
        %v367 = vsub.f32 %v254, %v366
        %368 = vmatmul.f32.gmra.mxu0 %v367
        %v369 = vpop.f32.mrf.mxu0
        %v370 = vadd.f32 %v336, %v369
        %371 = vdwg.mxu0
        %372 = vmatpush.msra.mxu0 0.0
        %373 = vmatpush.msra.mxu0 0.0
        %374 = vmatpush.msra.mxu0 0.0
        %375 = vmatpush.msra.mxu0 0.0
        %376 = vmatpush.msra.mxu0 0.0
        %377 = vmatpush.msra.mxu0 0.0
        %378 = vmatpush.msra.mxu0 0.0
        %379 = vmatpush.msra.mxu0 0.0
        %380 = vmatpush.msra.mxu0 0.0
        %381 = vmatpush.msra.mxu0 0.0
        %v382 = vand.u32 %v251, 4294901760
        %383 = vmatpush.msra.mxu0 %v382
        %v384 = vand.u32 %v250, 4294901760
        %385 = vmatpush.msra.mxu0 %v384
        %v386 = vand.u32 %v249, 4294901760
        %387 = vmatpush.msra.mxu0 %v386
        %v388 = vand.u32 %v248, 4294901760
        %389 = vmatpush.msra.mxu0 %v388
        %v390 = vand.u32 %v247, 4294901760
        %391 = vmatpush.msra.mxu0 %v390
        %v392 = vand.u32 %v246, 4294901760
        %393 = vmatpush.msra.mxu0 %v392
        %v394 = vand.u32 %v254, 4294901760
        %v395 = vsub.f32 %v254, %v394
        %v396 = vand.u32 %v395, 4294901760
        %397 = vmatmul.f32.gmra.mxu0 %v396
        %v398 = vpop.f32.mrf.mxu0
        %v399 = vadd.f32 %v370, %v398
        %400 = vdwg.mxu0
        %401 = vmatpush.msra.mxu0 0.0
        %402 = vmatpush.msra.mxu0 0.0
        %403 = vmatpush.msra.mxu0 0.0
        %404 = vmatpush.msra.mxu0 0.0
        %405 = vmatpush.msra.mxu0 0.0
        %406 = vmatpush.msra.mxu0 0.0
        %407 = vmatpush.msra.mxu0 0.0
        %408 = vmatpush.msra.mxu0 0.0
        %409 = vmatpush.msra.mxu0 0.0
        %410 = vmatpush.msra.mxu0 0.0
        %v411 = vand.u32 %v251, 4294901760
        %v412 = vsub.f32 %v251, %v411
        %v413 = vand.u32 %v412, 4294901760
        %414 = vmatpush.msra.mxu0 %v413
        %v415 = vand.u32 %v250, 4294901760
        %v416 = vsub.f32 %v250, %v415
        %v417 = vand.u32 %v416, 4294901760
        %418 = vmatpush.msra.mxu0 %v417
        %v419 = vand.u32 %v249, 4294901760
        %v420 = vsub.f32 %v249, %v419
        %v421 = vand.u32 %v420, 4294901760
        %422 = vmatpush.msra.mxu0 %v421
        %v423 = vand.u32 %v248, 4294901760
        %v424 = vsub.f32 %v248, %v423
        %v425 = vand.u32 %v424, 4294901760
        %426 = vmatpush.msra.mxu0 %v425
        %v427 = vand.u32 %v247, 4294901760
        %v428 = vsub.f32 %v247, %v427
        %v429 = vand.u32 %v428, 4294901760
        %430 = vmatpush.msra.mxu0 %v429
        %v431 = vand.u32 %v246, 4294901760
        %v432 = vsub.f32 %v246, %v431
        %v433 = vand.u32 %v432, 4294901760
        %434 = vmatpush.msra.mxu0 %v433
        %v435 = vand.u32 %v254, 4294901760
        %436 = vmatmul.f32.gmra.mxu0 %v435
        %v437 = vpop.f32.mrf.mxu0
        %v438 = vadd.f32 %v399, %v437
        %439 = vdwg.mxu0
        %440 = vmatpush.msra.mxu0 0.0
        %441 = vmatpush.msra.mxu0 0.0
        %442 = vmatpush.msra.mxu0 0.0
        %443 = vmatpush.msra.mxu0 0.0
        %444 = vmatpush.msra.mxu0 0.0
        %445 = vmatpush.msra.mxu0 0.0
        %446 = vmatpush.msra.mxu0 0.0
        %447 = vmatpush.msra.mxu0 0.0
        %448 = vmatpush.msra.mxu0 0.0
        %449 = vmatpush.msra.mxu0 0.0
        %v450 = vand.u32 %v251, 4294901760
        %451 = vmatpush.msra.mxu0 %v450
        %v452 = vand.u32 %v250, 4294901760
        %453 = vmatpush.msra.mxu0 %v452
        %v454 = vand.u32 %v249, 4294901760
        %455 = vmatpush.msra.mxu0 %v454
        %v456 = vand.u32 %v248, 4294901760
        %457 = vmatpush.msra.mxu0 %v456
        %v458 = vand.u32 %v247, 4294901760
        %459 = vmatpush.msra.mxu0 %v458
        %v460 = vand.u32 %v246, 4294901760
        %461 = vmatpush.msra.mxu0 %v460
        %v462 = vand.u32 %v254, 4294901760
        %463 = vmatmul.f32.gmra.mxu0 %v462
        %v464 = vpop.f32.mrf.mxu0
        %v465 = vadd.f32 %v438, %v464
        %466 = vdwg.mxu0
        %v467 = vmul.f32 %v465, 11.313708
        %468 = vset.pattern.permute.xlu0 1
        %469 = vperm.xlu0 %468, %v237
        %v470 = vpop.permute.xlu0 %469
        %vm471 = vcmp.eq.s32.totalorder %v239, %v470
        %v472 = vsel %vm471, 1, 0
        %v473 = vcvt.s32.f32 %v472
        %v474 = vld [vmem:[%s2] sm:$0xff]
        %v475 = vld [vmem:[%s2 + $0x8] sm:$0xff]
        %vm476 = vcmask 130048
        %v478 = vsel %vm476, %v473, 0
        %480 = vmatpush.msra.mxu0 0.0
        %481 = vmatpush.msra.mxu0 0.0
        %482 = vmatpush.msra.mxu0 0.0
        %483 = vmatpush.msra.mxu0 0.0
        %484 = vmatpush.msra.mxu0 0.0
        %485 = vmatpush.msra.mxu0 0.0
        %486 = vmatpush.msra.mxu0 0.0
        %487 = vmatpush.msra.mxu0 0.0
        %488 = vmatpush.msra.mxu0 0.0
        %489 = vmatpush.msra.mxu0 0.0
        %490 = vmatpush.msra.mxu0 0.0
        %491 = vmatpush.msra.mxu0 0.0
        %492 = vmatpush.msra.mxu0 0.0
        %493 = vmatpush.msra.mxu0 0.0
        %v494 = vand.u32 %v475, 4294901760
        %495 = vmatpush.msra.mxu0 %v494
        %v496 = vand.u32 %v474, 4294901760
        %497 = vmatpush.msra.mxu0 %v496
        %v498 = vand.u32 %v478, 4294901760
        %v499 = vsub.f32 %v478, %v498
        %v500 = vand.u32 %v499, 4294901760
        %v501 = vsub.f32 %v499, %v500
        %v502 = vand.u32 %v501, 4294901760
        %503 = vmatmul.f32.gmra.mxu0 %v502
        %v504 = vpop.f32.mrf.mxu0
        %v505 = vadd.f32 0.0, %v504
        %506 = vdwg.mxu0
        %507 = vmatpush.msra.mxu0 0.0
        %508 = vmatpush.msra.mxu0 0.0
        %509 = vmatpush.msra.mxu0 0.0
        %510 = vmatpush.msra.mxu0 0.0
        %511 = vmatpush.msra.mxu0 0.0
        %512 = vmatpush.msra.mxu0 0.0
        %513 = vmatpush.msra.mxu0 0.0
        %514 = vmatpush.msra.mxu0 0.0
        %515 = vmatpush.msra.mxu0 0.0
        %516 = vmatpush.msra.mxu0 0.0
        %517 = vmatpush.msra.mxu0 0.0
        %518 = vmatpush.msra.mxu0 0.0
        %519 = vmatpush.msra.mxu0 0.0
        %520 = vmatpush.msra.mxu0 0.0
        %v521 = vand.u32 %v475, 4294901760
        %v522 = vsub.f32 %v475, %v521
        %v523 = vand.u32 %v522, 4294901760
        %v524 = vsub.f32 %v522, %v523
        %v525 = vand.u32 %v524, 4294901760
        %526 = vmatpush.msra.mxu0 %v525
        %v527 = vand.u32 %v474, 4294901760
        %v528 = vsub.f32 %v474, %v527
        %v529 = vand.u32 %v528, 4294901760
        %v530 = vsub.f32 %v528, %v529
        %v531 = vand.u32 %v530, 4294901760
        %532 = vmatpush.msra.mxu0 %v531
        %v533 = vand.u32 %v478, 4294901760
        %534 = vmatmul.f32.gmra.mxu0 %v533
        %v535 = vpop.f32.mrf.mxu0
        %v536 = vadd.f32 %v505, %v535
        %537 = vdwg.mxu0
        %538 = vmatpush.msra.mxu0 0.0
        %539 = vmatpush.msra.mxu0 0.0
        %540 = vmatpush.msra.mxu0 0.0
        %541 = vmatpush.msra.mxu0 0.0
        %542 = vmatpush.msra.mxu0 0.0
        %543 = vmatpush.msra.mxu0 0.0
        %544 = vmatpush.msra.mxu0 0.0
        %545 = vmatpush.msra.mxu0 0.0
        %546 = vmatpush.msra.mxu0 0.0
        %547 = vmatpush.msra.mxu0 0.0
        %548 = vmatpush.msra.mxu0 0.0
        %549 = vmatpush.msra.mxu0 0.0
        %550 = vmatpush.msra.mxu0 0.0
        %551 = vmatpush.msra.mxu0 0.0
        %v552 = vand.u32 %v475, 4294901760
        %v553 = vsub.f32 %v475, %v552
        %554 = vmatpush.msra.mxu0 %v553
        %v555 = vand.u32 %v474, 4294901760
        %v556 = vsub.f32 %v474, %v555
        %557 = vmatpush.msra.mxu0 %v556
        %v558 = vand.u32 %v478, 4294901760
        %v559 = vsub.f32 %v478, %v558
        %560 = vmatmul.f32.gmra.mxu0 %v559
        %v561 = vpop.f32.mrf.mxu0
        %v562 = vadd.f32 %v536, %v561
        %563 = vdwg.mxu0
        %564 = vmatpush.msra.mxu0 0.0
        %565 = vmatpush.msra.mxu0 0.0
        %566 = vmatpush.msra.mxu0 0.0
        %567 = vmatpush.msra.mxu0 0.0
        %568 = vmatpush.msra.mxu0 0.0
        %569 = vmatpush.msra.mxu0 0.0
        %570 = vmatpush.msra.mxu0 0.0
        %571 = vmatpush.msra.mxu0 0.0
        %572 = vmatpush.msra.mxu0 0.0
        %573 = vmatpush.msra.mxu0 0.0
        %574 = vmatpush.msra.mxu0 0.0
        %575 = vmatpush.msra.mxu0 0.0
        %576 = vmatpush.msra.mxu0 0.0
        %577 = vmatpush.msra.mxu0 0.0
        %v578 = vand.u32 %v475, 4294901760
        %579 = vmatpush.msra.mxu0 %v578
        %v580 = vand.u32 %v474, 4294901760
        %581 = vmatpush.msra.mxu0 %v580
        %v582 = vand.u32 %v478, 4294901760
        %v583 = vsub.f32 %v478, %v582
        %v584 = vand.u32 %v583, 4294901760
        %585 = vmatmul.f32.gmra.mxu0 %v584
        %v586 = vpop.f32.mrf.mxu0
        %v587 = vadd.f32 %v562, %v586
        %588 = vdwg.mxu0
        %589 = vmatpush.msra.mxu0 0.0
        %590 = vmatpush.msra.mxu0 0.0
        %591 = vmatpush.msra.mxu0 0.0
        %592 = vmatpush.msra.mxu0 0.0
        %593 = vmatpush.msra.mxu0 0.0
        %594 = vmatpush.msra.mxu0 0.0
        %595 = vmatpush.msra.mxu0 0.0
        %596 = vmatpush.msra.mxu0 0.0
        %597 = vmatpush.msra.mxu0 0.0
        %598 = vmatpush.msra.mxu0 0.0
        %599 = vmatpush.msra.mxu0 0.0
        %600 = vmatpush.msra.mxu0 0.0
        %601 = vmatpush.msra.mxu0 0.0
        %602 = vmatpush.msra.mxu0 0.0
        %v603 = vand.u32 %v475, 4294901760
        %v604 = vsub.f32 %v475, %v603
        %v605 = vand.u32 %v604, 4294901760
        %606 = vmatpush.msra.mxu0 %v605
        %v607 = vand.u32 %v474, 4294901760
        %v608 = vsub.f32 %v474, %v607
        %v609 = vand.u32 %v608, 4294901760
        %610 = vmatpush.msra.mxu0 %v609
        %v611 = vand.u32 %v478, 4294901760
        %612 = vmatmul.f32.gmra.mxu0 %v611
        %v613 = vpop.f32.mrf.mxu0
        %v614 = vadd.f32 %v587, %v613
        %615 = vdwg.mxu0
        %616 = vmatpush.msra.mxu0 0.0
        %617 = vmatpush.msra.mxu0 0.0
        %618 = vmatpush.msra.mxu0 0.0
        %619 = vmatpush.msra.mxu0 0.0
        %620 = vmatpush.msra.mxu0 0.0
        %621 = vmatpush.msra.mxu0 0.0
        %622 = vmatpush.msra.mxu0 0.0
        %623 = vmatpush.msra.mxu0 0.0
        %624 = vmatpush.msra.mxu0 0.0
        %625 = vmatpush.msra.mxu0 0.0
        %626 = vmatpush.msra.mxu0 0.0
        %627 = vmatpush.msra.mxu0 0.0
        %628 = vmatpush.msra.mxu0 0.0
        %629 = vmatpush.msra.mxu0 0.0
        %v630 = vand.u32 %v475, 4294901760
        %631 = vmatpush.msra.mxu0 %v630
        %v632 = vand.u32 %v474, 4294901760
        %633 = vmatpush.msra.mxu0 %v632
        %v634 = vand.u32 %v478, 4294901760
        %635 = vmatmul.f32.gmra.mxu0 %v634
        %v636 = vpop.f32.mrf.mxu0
        %v637 = vadd.f32 %v614, %v636
        %638 = vdwg.mxu0
        %v639 = vadd.f32 %v467, %v637
        %v640 = vld [vmem:[%s3] sm:$0x3]
        %v641 = vperm.slane %v640, 0
        %vm642 = vcmp.eq.s32.totalorder %v237, 1
        %v643 = vsel %vm642, 1, 0
        %644 = vset.pattern.permute.xlu0 2
        %645 = vperm.xlu0 %644, %v643
        %v646 = vpop.permute.xlu0 %645
        %vm647 = vcmp.eq.s32.totalorder %v646, 1
        %v648 = vperm.slane %v640, 1
        %v649 = vsel %vm647, %v648, %v641
        %v650 = vadd.f32 %v639, %v649
        %651 = vadd.xlane.f32.xlu0 %v650
        %v652 = vpop.xlane.xlu0 %651
        %v653 = vrcp.pop 128.0
        %v654 = vmul.f32 128.0, %v653
        %v655 = vsub.f32 1.0, %v654
        %v656 = vmul.f32 %v653, %v655
        %v657 = vadd.f32 %v653, %v656
        %vm658 = vweird.f32 %v653
        %v659 = vsel %vm658, %v653, %v657
        %v660 = vmul.f32 %v652, %v659
        %v661 = vsub.f32 %v650, %v660
        %v662 = vmul.f32 %v661, %v661
        %663 = vadd.xlane.f32.xlu0 %v662
        %v664 = vpop.xlane.xlu0 %663
        %v665 = vmul.f32 %v664, %v659
        %v666 = vadd.f32 %v665, 1e-06
        %v667 = vrsqrt.pop %v666
        %v668 = vmul.f32 %v667, %v666
        %v669 = vmul.f32 %v668, %v667
        %v670 = vmul.f32 0.5, %v669
        %v671 = vsub.f32 1.5, %v670
        %v672 = vmul.f32 %v667, %v671
        %vm673 = vweird.f32 %v666
        %vm674 = vweird.f32 %v667
        %vm675 = vmor %vm673, %vm674
        %v676 = vsel %vm675, %v667, %v672
        %v677 = vmul.f32 %v661, %v676
        %v678 = vld [vmem:[%s4] sm:$0x1]
        %v679 = vld [vmem:[%s4 + $0x1] sm:$0x1]
        %v680 = vperm.slane %v678, 0
        %v681 = vmul.f32 %v677, %v680
        %v682 = vperm.slane %v679, 0
        %v683 = vadd.f32 %v681, %v682
        %684 = vst [vmem:[%s232] sm:$0xff] %v683
        %s685 = sand.u32 %s138, 1
        %s686 = scalar_lea.sflag [#allocation4], %s685
        %s687 = sand.u32 %s138, 1
        %s688 = smul.addr %s687, 8
        %s689 = scalar_lea.vmem [#allocation5], %s688
        // Predicated region
        $region45: #{tpu_custom_call.1} parent=39 // pred_check
          %p690 = pneg %p148
        $region46: #{tpu_custom_call.1} parent=39 // pred_check_branch
          %692 = sbr.rel (%p690) target = $region48
        $region47: #{tpu_custom_call.1} parent=39 // pred_region
          %694 = vsyncadd %s686, 0
          %s695 = smul.addr %s20, 8
          %s696 = scalar_lea.hbm %s5, %s695
          %s698 = sshll.u32 %s689, 4
          %s699 = int_to_ptr.vmem [resolvable:$true] %s698
          %s700 = sshll.u32 %s696, 4
          %s701 = int_to_ptr.hbm [resolvable:$true] %s700
          %703 = dma.vmem_to_hbm [thread:$0]  %s699, 128, %s701, %s686
        $region48: #{tpu_custom_call.1} parent=39 // pred_fallthru
          _
      $region40: #{tpu_custom_call.1} parent=5 // pred_fallthru
        _
      %p704 = scmp.le.s32.totalorder 2, %s15
      // Predicated region
      $region49: #{tpu_custom_call.1} parent=5 // pred_check
        %p705 = pneg %p704
      $region50: #{tpu_custom_call.1} parent=5 // pred_check_branch
        %707 = sbr.rel (%p705) target = $region52
      $region51: #{tpu_custom_call.1} parent=5 // pred_region
        %s708 = ssub.s32 %s15, 2
        // Predicated region
        $region53: #{tpu_custom_call.1} parent=51 // pred_check
          %p709 = pneg %p154
        $region54: #{tpu_custom_call.1} parent=51 // pred_check_branch
          %711 = sbr.rel (%p709) target = $region56
        $region55: #{tpu_custom_call.1} parent=51 // pred_region
          %s712 = sand.u32 %s139, 1
          %s713 = scalar_lea.sflag [#allocation4], %s712
          %s714 = sand.u32 %s139, 1
          %s715 = smul.addr %s714, 8
          %s716 = scalar_lea.vmem [#allocation5], %s715
          %718 = dma.done %s713, 128
        $region56: #{tpu_custom_call.1} parent=51 // pred_fallthru
          _
      $region52: #{tpu_custom_call.1} parent=5 // pred_fallthru
        _
    $region6: #{tpu_custom_call.1} parent=1 // loop_footer
      %s19 = sadd.s32 1, %s15
    $region7: #{tpu_custom_call.1} parent=1 // loop_footer_branch
      %14 = sbr.rel target = $region3
    $region8: #{tpu_custom_call.1} parent=1 // loop_exit
      _
    %719 = vsyncpa [#allocation3], 1
    %s720 = scalar_lea.sflag [#allocation3], 1
    %721 = vsyncpa %s720, 1
    %722 = vsyncpa [#allocation4], 1
    %s723 = scalar_lea.sflag [#allocation4], 1
    %724 = vsyncpa %s723, 1

</llo_original>
